<compile_context>
chip_gen: v6e
topology: v6e:2x2x1
jax: 0.10.0
libtpu: 0.0.40
codegen_flags: <defaults>
</compile_context>

<pallas_src>
import functools

import jax
import jax.numpy as jnp
from jax import lax
from jax.experimental import pallas as pl
from jax.experimental.pallas import tpu as pltpu

_LANE = 128      # lane (minor-most) tile
_SUBLANE = 8     # sublane (second-minor) tile


def _round_up(n, m):
    return (n + m - 1) // m * m


def _pad_to(a, size, axis):
    pad = size - a.shape[axis]
    if pad == 0:
        return a
    widths = [(0, 0)] * a.ndim
    widths[axis] = (0, pad)
    return jnp.pad(a, widths)


def _make_recurrence_kernel(layer_dim, chunk, hidden_p, unroll):
    """Multi-layer ReLU-RNN recurrence over one (batch block, seq chunk).

    args = (p0_ref, whh0_ref, [wih_l, whh_l, b_l]_{l=1..L-1}, out_ref,
            h_carry, [buf_hidden, buf_proj])
      p0_ref  : (chunk, bb, Hp) layer-0 pre-activations (x @ Wih0 + b0), hoisted
      out_ref : (chunk, bb, Hp) top-layer hidden state for every timestep of the chunk
      h_carry : VMEM (layer_dim, bb, Hp) hidden state carried across seq chunks
      buf_*   : VMEM (chunk, bb, Hp) scratch for intermediate-layer hiddens / projections
    """

    def kernel(*args):
        p0_ref = args[0]
        whh0_ref = args[1]
        deep = args[2:2 + 3 * (layer_dim - 1)]
        out_ref = args[2 + 3 * (layer_dim - 1)]
        scratch = args[3 + 3 * (layer_dim - 1):]
        h_carry = scratch[0]
        bufs = scratch[1:]

        bb = p0_ref.shape[1]
        c = pl.program_id(1)           # seq-chunk index (innermost, "arbitrary")

        @pl.when(c == 0)
        def _():
            h_carry[...] = jnp.zeros_like(h_carry)

        def recurrence(proj_ref, whh, dst_ref, layer):
            # h_t = relu(proj_t + h_{t-1} @ Whh); only h @ Whh is on the serial chain.
            # proj_ref and dst_ref are always distinct refs (no false dependencies).
            def body(t, h):
                h_new = jnp.maximum(
                    proj_ref[t]
                    + jnp.dot(h, whh, preferred_element_type=jnp.float32),
                    0.0,
                )
                dst_ref[t] = h_new
                return h_new

            h_last = lax.fori_loop(0, chunk, body, h_carry[layer], unroll=unroll)
            h_carry[layer] = h_last

        # ---- layer 0 ----
        dst = out_ref if layer_dim == 1 else bufs[0]
        recurrence(p0_ref, whh0_ref[...], dst, 0)

        # ---- layers 1 .. L-1 ----
        src = dst
        for l in range(1, layer_dim):
            wih = deep[3 * (l - 1)][...]
            whh = deep[3 * (l - 1) + 1][...]
            b = deep[3 * (l - 1) + 2][...]

            # Flattened per-layer input projection (+ single bias broadcast): one GEMM
            # with M = chunk*bb rows, written to a separate projection buffer.
            proj = (
                jnp.dot(src[...].reshape(chunk * bb, hidden_p), wih,
                        preferred_element_type=jnp.float32)
                + b
            )
            bufs[1][...] = proj.reshape(chunk, bb, hidden_p)

            dst = out_ref if l == layer_dim - 1 else bufs[0]
            recurrence(bufs[1], whh, dst, l)
            src = dst

    return kernel


def rnn_model_forward(x, params, *, hidden_dim, layer_dim, output_dim, seq_chunk=64):
    """x: (batch, seq, input_dim) f32 -> (batch, seq, output_dim) f32."""
    batch, seq, input_dim = x.shape
    hidden_p = _round_up(hidden_dim, _LANE)

    # Batch blocking: rows are independent; split into two blocks when large enough so the
    # "parallel" grid axis can land on v7x's two TensorCores (single block otherwise).
    nb = 2 if batch >= 16 else 1
    bb = _round_up(pl.cdiv(batch, nb), _SUBLANE)
    batch_p = nb * bb

    # Sequence chunking: bounds VMEM independent of seq and pipelines p0/out DMA.
    chunk = max(1, min(seq_chunk, seq))
    n_chunks = pl.cdiv(seq, chunk)
    seq_p = n_chunks * chunk

    # Zero-pad batch (rows discarded at the end) and seq (trailing timesteps discarded).
    x_p = _pad_to(_pad_to(x, batch_p, axis=0), seq_p, axis=1)

    # ---- hoisted layer-0 input projection: one big GEMM, emitted time-major ----
    wih0_t, whh0_t, b0 = params["rnn"][0]            # (in, H), (H, H), (1, H)
    wih0_p = _pad_to(wih0_t, hidden_p, axis=1)
    whh0_p = _pad_to(_pad_to(whh0_t, hidden_p, axis=0), hidden_p, axis=1)
    b0_p = _pad_to(b0, hidden_p, axis=1)
    p0 = jnp.einsum("bti,ih->tbh", x_p, wih0_p) + b0_p      # (seq_p, batch_p, Hp)

    flat = [p0, whh0_p]
    for l in range(1, layer_dim):
        wih_t, whh_t, b = params["rnn"][l]
        flat += [
            _pad_to(_pad_to(wih_t, hidden_p, axis=0), hidden_p, axis=1),
            _pad_to(_pad_to(whh_t, hidden_p, axis=0), hidden_p, axis=1),
            _pad_to(b, hidden_p, axis=1),
        ]

    def _const(shape):
        return pl.BlockSpec(shape, lambda i, c: (0,) * len(shape))

    in_specs = [pl.BlockSpec((chunk, bb, hidden_p), lambda i, c: (c, i, 0)),
                _const((hidden_p, hidden_p))]
    for _ in range(1, layer_dim):
        in_specs += [_const((hidden_p, hidden_p)),
                     _const((hidden_p, hidden_p)),
                     _const((1, hidden_p))]

    n_bufs = 2 if layer_dim >= 2 else 0
    scratch_shapes = [pltpu.VMEM((layer_dim, bb, hidden_p), jnp.float32)]
    scratch_shapes += [pltpu.VMEM((chunk, bb, hidden_p), jnp.float32)
                       for _ in range(n_bufs)]

    # VMEM budget: double-buffered p0/out blocks + double-buffered weights + scratch,
    # with headroom for semaphores / internal scratch.
    blk_bytes = chunk * bb * hidden_p * 4
    w_bytes = (hidden_p * hidden_p * 4 * (1 + 2 * (layer_dim - 1))
               + hidden_p * 4 * (layer_dim - 1))
    scratch_bytes = layer_dim * bb * hidden_p * 4 + n_bufs * blk_bytes
    vmem_limit = int((4 * blk_bytes + 2 * w_bytes + scratch_bytes) * 1.25) + (2 << 20)
    vmem_limit = min(vmem_limit, 100 * 1024 * 1024)

    unroll = int(min(8, chunk))        # capped unroll: the chain is serial anyway

    h_top = pl.pallas_call(
        _make_recurrence_kernel(layer_dim, chunk, hidden_p, unroll),
        out_shape=jax.ShapeDtypeStruct((seq_p, batch_p, hidden_p), jnp.float32),
        grid=(nb, n_chunks),
        in_specs=in_specs,
        out_specs=pl.BlockSpec((chunk, bb, hidden_p), lambda i, c: (c, i, 0)),
        scratch_shapes=scratch_shapes,
        compiler_params=pltpu.CompilerParams(
            dimension_semantics=("parallel", "arbitrary"),
            vmem_limit_bytes=vmem_limit,
        ),
    )(*flat)

    # ---- hoisted output Linear: one GEMM over all timesteps, back to batch-first ----
    w_lin_t, b_lin = params["lin"]                   # (H, O), (1, O)
    w_lin_p = _pad_to(w_lin_t, hidden_p, axis=0)     # zero rows for padded hidden units
    out = jnp.einsum("tbh,ho->bto", h_top, w_lin_p) + b_lin   # (batch_p, seq_p, O)
    return out[:batch, :seq]


def rnn_model_reference(x, params):
    """Pure-JAX reference mirroring torch.nn.RNN(nonlinearity='relu') + Linear."""
    batch, seq, _ = x.shape
    layer_in = x
    for wih_t, whh_t, b in params["rnn"]:
        h = jnp.zeros((batch, whh_t.shape[0]), jnp.float32)
        outs = []
        for t in range(seq):
            h = jnp.maximum(layer_in[:, t] @ wih_t + h @ whh_t + b[0], 0.0)
            outs.append(h)
        layer_in = jnp.stack(outs, axis=1)
    w_lin_t, b_lin = params["lin"]
    return layer_in @ w_lin_t + b_lin[0]


def init_params(key, input_dim, hidden_dim, layer_dim, output_dim):
    """Deterministic init mimicking PyTorch defaults: U(-1/sqrt(hidden), 1/sqrt(hidden))."""
    keys = jax.random.split(key, 4 * layer_dim + 2)
    kidx = 0
    bound = 1.0 / float(hidden_dim) ** 0.5

    rnn_params = []
    for l in range(layer_dim):
        in_dim = input_dim if l == 0 else hidden_dim
        wih = jax.random.uniform(keys[kidx], (hidden_dim, in_dim), jnp.float32, -bound, bound); kidx += 1
        whh = jax.random.uniform(keys[kidx], (hidden_dim, hidden_dim), jnp.float32, -bound, bound); kidx += 1
        bih = jax.random.uniform(keys[kidx], (hidden_dim,), jnp.float32, -bound, bound); kidx += 1
        bhh = jax.random.uniform(keys[kidx], (hidden_dim,), jnp.float32, -bound, bound); kidx += 1
        # stored transposed for `x @ W`, combined bias as (1, hidden)
        rnn_params.append((wih.T, whh.T, (bih + bhh)[None, :]))

    w_lin = jax.random.uniform(keys[kidx], (output_dim, hidden_dim), jnp.float32, -bound, bound); kidx += 1
    b_lin = jax.random.uniform(keys[kidx], (output_dim,), jnp.float32, -bound, bound); kidx += 1
    return {"rnn": rnn_params, "lin": (w_lin.T, b_lin[None, :])}


if __name__ == "__main__":
    batch, seq, input_dim = 2, 8, 16
    hidden_dim, layer_dim, output_dim = 32, 2, 8

    key = jax.random.PRNGKey(0)
    key_x, key_p = jax.random.split(key)

    x = jax.random.normal(key_x, (batch, seq, input_dim), dtype=jnp.float32)
    params = init_params(key_p, input_dim, hidden_dim, layer_dim, output_dim)

    # seq_chunk=4 -> 2 seq chunks, so the carried-hidden / chunked-pipeline path is exercised.
    fwd = functools.partial(
        rnn_model_forward, hidden_dim=hidden_dim, layer_dim=layer_dim,
        output_dim=output_dim, seq_chunk=4,
    )
    out = jax.block_until_ready(fwd(x, params))
    ref = jax.block_until_ready(rnn_model_reference(x, params))

    assert out.shape == (batch, seq, output_dim), out.shape
    assert jnp.allclose(out, ref, atol=2e-5, rtol=2e-5), (
        "mismatch vs reference: max abs err %e" % float(jnp.max(jnp.abs(out - ref)))
    )
    print("KERNEL_OK")
</pallas_src>

<mosaic_0001>
module attributes {stable_mosaic.version = 11 : i64} {
  func.func @kernel(%arg0: i32, %arg1: i32, %arg2: memref<4x8x128xf32, #tpu.memory_space<vmem>>, %arg3: memref<128x128xf32, #tpu.memory_space<vmem>>, %arg4: memref<128x128xf32, #tpu.memory_space<vmem>>, %arg5: memref<128x128xf32, #tpu.memory_space<vmem>>, %arg6: memref<1x128xf32, #tpu.memory_space<vmem>>, %arg7: memref<4x8x128xf32, #tpu.memory_space<vmem>>, %arg8: memref<2x8x128xf32, #tpu.memory_space<vmem>>, %arg9: memref<4x8x128xf32, #tpu.memory_space<vmem>>, %arg10: memref<4x8x128xf32, #tpu.memory_space<vmem>>) attributes {dimension_semantics = [#tpu.dimension_semantics<parallel>, #tpu.dimension_semantics<arbitrary>], iteration_bounds = array<i64: 1, 2>, scalar_prefetch = 0 : i64, scratch_operands = 3 : i64, tpu.core_type = #tpu.core_type<tc>, window_params = [{transform_indices = @transform_0, window_bounds = array<i64: 4, 8, 128>}, {pipeline_mode = #tpu.pipeline_mode<synchronous>, transform_indices = @transform_1, window_bounds = array<i64: 128, 128>}, {pipeline_mode = #tpu.pipeline_mode<synchronous>, transform_indices = @transform_2, window_bounds = array<i64: 128, 128>}, {pipeline_mode = #tpu.pipeline_mode<synchronous>, transform_indices = @transform_3, window_bounds = array<i64: 128, 128>}, {pipeline_mode = #tpu.pipeline_mode<synchronous>, transform_indices = @transform_4, window_bounds = array<i64: 1, 128>}, {transform_indices = @transform_5, window_bounds = array<i64: 4, 8, 128>}]} {
    %c0_i32 = arith.constant 0 : i32
    %0 = arith.cmpi eq, %arg1, %c0_i32 : i32
    %1 = arith.extui %0 : i1 to i32
    %c0_i32_0 = arith.constant 0 : i32
    %2 = arith.cmpi ne, %1, %c0_i32_0 : i32
    scf.if %2 {
      %cst_79 = arith.constant 0.000000e+00 : f32
      %112 = vector.broadcast %cst_79 : f32 to vector<2x8x128xf32>
      %c0_80 = arith.constant 0 : index
      %c0_81 = arith.constant 0 : index
      %c0_82 = arith.constant 0 : index
      %113 = vector.load %arg8[%c0_80, %c0_81, %c0_82] : memref<2x8x128xf32, #tpu.memory_space<vmem>>, vector<2x8x128xf32>
      tpu.vector_store %arg8[%c0_80, %c0_81, %c0_82], %112 {strides = array<i32>} : memref<2x8x128xf32, #tpu.memory_space<vmem>>, vector<2x8x128xf32>,
    } else {
    }
    %c0 = arith.constant 0 : index
    %c0_1 = arith.constant 0 : index
    %3 = vector.load %arg3[%c0, %c0_1] : memref<128x128xf32, #tpu.memory_space<vmem>>, vector<128x128xf32>
    %c0_2 = arith.constant 0 : index
    %c0_3 = arith.constant 0 : index
    %c0_4 = arith.constant 0 : index
    %4 = vector.load %arg8[%c0_2, %c0_3, %c0_4] : memref<2x8x128xf32, #tpu.memory_space<vmem>>, vector<1x8x128xf32>
    %5 = vector.shape_cast %4 : vector<1x8x128xf32> to vector<8x128xf32>
    %c0_i32_5 = arith.constant 0 : i32
    %6 = arith.index_cast %c0_i32_5 : i32 to index
    %c0_6 = arith.constant 0 : index
    %c0_7 = arith.constant 0 : index
    %7 = vector.load %arg2[%6, %c0_6, %c0_7] : memref<4x8x128xf32, #tpu.memory_space<vmem>>, vector<1x8x128xf32>
    %8 = vector.shape_cast %7 : vector<1x8x128xf32> to vector<8x128xf32>
    %cst = arith.constant dense<0.000000e+00> : vector<8x128xf32>
    %9 = tpu.matmul %5, %3, %cst {dimension_numbers = #tpu.dot_dimension_numbers<[1], [0], [0], [1], [0, 0, 1, 1], [], []>} : vector<8x128xf32>, vector<128x128xf32>, vector<8x128xf32> -> vector<8x128xf32>
    %10 = arith.addf %8, %9 : vector<8x128xf32>
    %cst_8 = arith.constant 0.000000e+00 : f32
    %11 = vector.broadcast %cst_8 : f32 to vector<8x128xf32>
    %12 = arith.maximumf %10, %11 : vector<8x128xf32>
    %13 = arith.index_cast %c0_i32_5 : i32 to index
    %c0_9 = arith.constant 0 : index
    %c0_10 = arith.constant 0 : index
    %14 = vector.load %arg9[%13, %c0_9, %c0_10] : memref<4x8x128xf32, #tpu.memory_space<vmem>>, vector<1x8x128xf32>
    %15 = vector.shape_cast %14 : vector<1x8x128xf32> to vector<8x128xf32>
    %16 = vector.shape_cast %12 : vector<8x128xf32> to vector<1x8x128xf32>
    tpu.vector_store %arg9[%13, %c0_9, %c0_10], %16 {strides = array<i32>} : memref<4x8x128xf32, #tpu.memory_space<vmem>>, vector<1x8x128xf32>,
    %c1_i32 = arith.constant 1 : i32
    %17 = arith.index_cast %c1_i32 : i32 to index
    %c0_11 = arith.constant 0 : index
    %c0_12 = arith.constant 0 : index
    %18 = vector.load %arg2[%17, %c0_11, %c0_12] : memref<4x8x128xf32, #tpu.memory_space<vmem>>, vector<1x8x128xf32>
    %19 = vector.shape_cast %18 : vector<1x8x128xf32> to vector<8x128xf32>
    %cst_13 = arith.constant dense<0.000000e+00> : vector<8x128xf32>
    %20 = tpu.matmul %12, %3, %cst_13 {dimension_numbers = #tpu.dot_dimension_numbers<[1], [0], [0], [1], [0, 0, 1, 1], [], []>} : vector<8x128xf32>, vector<128x128xf32>, vector<8x128xf32> -> vector<8x128xf32>
    %21 = arith.addf %19, %20 : vector<8x128xf32>
    %cst_14 = arith.constant 0.000000e+00 : f32
    %22 = vector.broadcast %cst_14 : f32 to vector<8x128xf32>
    %23 = arith.maximumf %21, %22 : vector<8x128xf32>
    %24 = arith.index_cast %c1_i32 : i32 to index
    %c0_15 = arith.constant 0 : index
    %c0_16 = arith.constant 0 : index
    %25 = vector.load %arg9[%24, %c0_15, %c0_16] : memref<4x8x128xf32, #tpu.memory_space<vmem>>, vector<1x8x128xf32>
    %26 = vector.shape_cast %25 : vector<1x8x128xf32> to vector<8x128xf32>
    %27 = vector.shape_cast %23 : vector<8x128xf32> to vector<1x8x128xf32>
    tpu.vector_store %arg9[%24, %c0_15, %c0_16], %27 {strides = array<i32>} : memref<4x8x128xf32, #tpu.memory_space<vmem>>, vector<1x8x128xf32>,
    %c2_i32 = arith.constant 2 : i32
    %28 = arith.index_cast %c2_i32 : i32 to index
    %c0_17 = arith.constant 0 : index
    %c0_18 = arith.constant 0 : index
    %29 = vector.load %arg2[%28, %c0_17, %c0_18] : memref<4x8x128xf32, #tpu.memory_space<vmem>>, vector<1x8x128xf32>
    %30 = vector.shape_cast %29 : vector<1x8x128xf32> to vector<8x128xf32>
    %cst_19 = arith.constant dense<0.000000e+00> : vector<8x128xf32>
    %31 = tpu.matmul %23, %3, %cst_19 {dimension_numbers = #tpu.dot_dimension_numbers<[1], [0], [0], [1], [0, 0, 1, 1], [], []>} : vector<8x128xf32>, vector<128x128xf32>, vector<8x128xf32> -> vector<8x128xf32>
    %32 = arith.addf %30, %31 : vector<8x128xf32>
    %cst_20 = arith.constant 0.000000e+00 : f32
    %33 = vector.broadcast %cst_20 : f32 to vector<8x128xf32>
    %34 = arith.maximumf %32, %33 : vector<8x128xf32>
    %35 = arith.index_cast %c2_i32 : i32 to index
    %c0_21 = arith.constant 0 : index
    %c0_22 = arith.constant 0 : index
    %36 = vector.load %arg9[%35, %c0_21, %c0_22] : memref<4x8x128xf32, #tpu.memory_space<vmem>>, vector<1x8x128xf32>
    %37 = vector.shape_cast %36 : vector<1x8x128xf32> to vector<8x128xf32>
    %38 = vector.shape_cast %34 : vector<8x128xf32> to vector<1x8x128xf32>
    tpu.vector_store %arg9[%35, %c0_21, %c0_22], %38 {strides = array<i32>} : memref<4x8x128xf32, #tpu.memory_space<vmem>>, vector<1x8x128xf32>,
    %c3_i32 = arith.constant 3 : i32
    %39 = arith.index_cast %c3_i32 : i32 to index
    %c0_23 = arith.constant 0 : index
    %c0_24 = arith.constant 0 : index
    %40 = vector.load %arg2[%39, %c0_23, %c0_24] : memref<4x8x128xf32, #tpu.memory_space<vmem>>, vector<1x8x128xf32>
    %41 = vector.shape_cast %40 : vector<1x8x128xf32> to vector<8x128xf32>
    %cst_25 = arith.constant dense<0.000000e+00> : vector<8x128xf32>
    %42 = tpu.matmul %34, %3, %cst_25 {dimension_numbers = #tpu.dot_dimension_numbers<[1], [0], [0], [1], [0, 0, 1, 1], [], []>} : vector<8x128xf32>, vector<128x128xf32>, vector<8x128xf32> -> vector<8x128xf32>
    %43 = arith.addf %41, %42 : vector<8x128xf32>
    %cst_26 = arith.constant 0.000000e+00 : f32
    %44 = vector.broadcast %cst_26 : f32 to vector<8x128xf32>
    %45 = arith.maximumf %43, %44 : vector<8x128xf32>
    %46 = arith.index_cast %c3_i32 : i32 to index
    %c0_27 = arith.constant 0 : index
    %c0_28 = arith.constant 0 : index
    %47 = vector.load %arg9[%46, %c0_27, %c0_28] : memref<4x8x128xf32, #tpu.memory_space<vmem>>, vector<1x8x128xf32>
    %48 = vector.shape_cast %47 : vector<1x8x128xf32> to vector<8x128xf32>
    %49 = vector.shape_cast %45 : vector<8x128xf32> to vector<1x8x128xf32>
    tpu.vector_store %arg9[%46, %c0_27, %c0_28], %49 {strides = array<i32>} : memref<4x8x128xf32, #tpu.memory_space<vmem>>, vector<1x8x128xf32>,
    %c4_i32 = arith.constant 4 : i32
    %c0_29 = arith.constant 0 : index
    %c0_30 = arith.constant 0 : index
    %c0_31 = arith.constant 0 : index
    %50 = vector.load %arg8[%c0_29, %c0_30, %c0_31] : memref<2x8x128xf32, #tpu.memory_space<vmem>>, vector<1x8x128xf32>
    %51 = vector.shape_cast %50 : vector<1x8x128xf32> to vector<8x128xf32>
    %52 = vector.shape_cast %45 : vector<8x128xf32> to vector<1x8x128xf32>
    tpu.vector_store %arg8[%c0_29, %c0_30, %c0_31], %52 {strides = array<i32>} : memref<2x8x128xf32, #tpu.memory_space<vmem>>, vector<1x8x128xf32>,
    %c0_32 = arith.constant 0 : index
    %c0_33 = arith.constant 0 : index
    %53 = vector.load %arg4[%c0_32, %c0_33] : memref<128x128xf32, #tpu.memory_space<vmem>>, vector<128x128xf32>
    %c0_34 = arith.constant 0 : index
    %c0_35 = arith.constant 0 : index
    %54 = vector.load %arg5[%c0_34, %c0_35] : memref<128x128xf32, #tpu.memory_space<vmem>>, vector<128x128xf32>
    %c0_36 = arith.constant 0 : index
    %c0_37 = arith.constant 0 : index
    %55 = vector.load %arg6[%c0_36, %c0_37] : memref<1x128xf32, #tpu.memory_space<vmem>>, vector<1x128xf32>
    %c0_38 = arith.constant 0 : index
    %c0_39 = arith.constant 0 : index
    %c0_40 = arith.constant 0 : index
    %56 = vector.load %arg9[%c0_38, %c0_39, %c0_40] : memref<4x8x128xf32, #tpu.memory_space<vmem>>, vector<4x8x128xf32>
    %57 = vector.shape_cast %56 : vector<4x8x128xf32> to vector<32x128xf32>
    %cst_41 = arith.constant dense<0.000000e+00> : vector<32x128xf32>
    %58 = tpu.matmul %57, %53, %cst_41 {dimension_numbers = #tpu.dot_dimension_numbers<[1], [0], [0], [1], [0, 0, 1, 1], [], []>} : vector<32x128xf32>, vector<128x128xf32>, vector<32x128xf32> -> vector<32x128xf32>
    %59 = vector.broadcast %55 : vector<1x128xf32> to vector<32x128xf32>
    %60 = arith.addf %58, %59 : vector<32x128xf32>
    %61 = vector.shape_cast %60 : vector<32x128xf32> to vector<4x8x128xf32>
    %c0_42 = arith.constant 0 : index
    %c0_43 = arith.constant 0 : index
    %c0_44 = arith.constant 0 : index
    %62 = vector.load %arg10[%c0_42, %c0_43, %c0_44] : memref<4x8x128xf32, #tpu.memory_space<vmem>>, vector<4x8x128xf32>
    tpu.vector_store %arg10[%c0_42, %c0_43, %c0_44], %61 {strides = array<i32>} : memref<4x8x128xf32, #tpu.memory_space<vmem>>, vector<4x8x128xf32>,
    %c1 = arith.constant 1 : index
    %c0_45 = arith.constant 0 : index
    %c0_46 = arith.constant 0 : index
    %63 = vector.load %arg8[%c1, %c0_45, %c0_46] : memref<2x8x128xf32, #tpu.memory_space<vmem>>, vector<1x8x128xf32>
    %64 = vector.shape_cast %63 : vector<1x8x128xf32> to vector<8x128xf32>
    %c0_i32_47 = arith.constant 0 : i32
    %65 = arith.index_cast %c0_i32_47 : i32 to index
    %c0_48 = arith.constant 0 : index
    %c0_49 = arith.constant 0 : index
    %66 = vector.load %arg10[%65, %c0_48, %c0_49] : memref<4x8x128xf32, #tpu.memory_space<vmem>>, vector<1x8x128xf32>
    %67 = vector.shape_cast %66 : vector<1x8x128xf32> to vector<8x128xf32>
    %cst_50 = arith.constant dense<0.000000e+00> : vector<8x128xf32>
    %68 = tpu.matmul %64, %54, %cst_50 {dimension_numbers = #tpu.dot_dimension_numbers<[1], [0], [0], [1], [0, 0, 1, 1], [], []>} : vector<8x128xf32>, vector<128x128xf32>, vector<8x128xf32> -> vector<8x128xf32>
    %69 = arith.addf %67, %68 : vector<8x128xf32>
    %cst_51 = arith.constant 0.000000e+00 : f32
    %70 = vector.broadcast %cst_51 : f32 to vector<8x128xf32>
    %71 = arith.maximumf %69, %70 : vector<8x128xf32>
    %72 = arith.index_cast %c0_i32_47 : i32 to index
    %c0_52 = arith.constant 0 : index
    %c0_53 = arith.constant 0 : index
    %73 = vector.load %arg7[%72, %c0_52, %c0_53] : memref<4x8x128xf32, #tpu.memory_space<vmem>>, vector<1x8x128xf32>
    %74 = vector.shape_cast %73 : vector<1x8x128xf32> to vector<8x128xf32>
    %75 = vector.shape_cast %71 : vector<8x128xf32> to vector<1x8x128xf32>
    tpu.vector_store %arg7[%72, %c0_52, %c0_53], %75 {strides = array<i32>} : memref<4x8x128xf32, #tpu.memory_space<vmem>>, vector<1x8x128xf32>,
    %c1_i32_54 = arith.constant 1 : i32
    %76 = arith.index_cast %c1_i32_54 : i32 to index
    %c0_55 = arith.constant 0 : index
    %c0_56 = arith.constant 0 : index
    %77 = vector.load %arg10[%76, %c0_55, %c0_56] : memref<4x8x128xf32, #tpu.memory_space<vmem>>, vector<1x8x128xf32>
    %78 = vector.shape_cast %77 : vector<1x8x128xf32> to vector<8x128xf32>
    %cst_57 = arith.constant dense<0.000000e+00> : vector<8x128xf32>
    %79 = tpu.matmul %71, %54, %cst_57 {dimension_numbers = #tpu.dot_dimension_numbers<[1], [0], [0], [1], [0, 0, 1, 1], [], []>} : vector<8x128xf32>, vector<128x128xf32>, vector<8x128xf32> -> vector<8x128xf32>
    %80 = arith.addf %78, %79 : vector<8x128xf32>
    %cst_58 = arith.constant 0.000000e+00 : f32
    %81 = vector.broadcast %cst_58 : f32 to vector<8x128xf32>
    %82 = arith.maximumf %80, %81 : vector<8x128xf32>
    %83 = arith.index_cast %c1_i32_54 : i32 to index
    %c0_59 = arith.constant 0 : index
    %c0_60 = arith.constant 0 : index
    %84 = vector.load %arg7[%83, %c0_59, %c0_60] : memref<4x8x128xf32, #tpu.memory_space<vmem>>, vector<1x8x128xf32>
    %85 = vector.shape_cast %84 : vector<1x8x128xf32> to vector<8x128xf32>
    %86 = vector.shape_cast %82 : vector<8x128xf32> to vector<1x8x128xf32>
    tpu.vector_store %arg7[%83, %c0_59, %c0_60], %86 {strides = array<i32>} : memref<4x8x128xf32, #tpu.memory_space<vmem>>, vector<1x8x128xf32>,
    %c2_i32_61 = arith.constant 2 : i32
    %87 = arith.index_cast %c2_i32_61 : i32 to index
    %c0_62 = arith.constant 0 : index
    %c0_63 = arith.constant 0 : index
    %88 = vector.load %arg10[%87, %c0_62, %c0_63] : memref<4x8x128xf32, #tpu.memory_space<vmem>>, vector<1x8x128xf32>
    %89 = vector.shape_cast %88 : vector<1x8x128xf32> to vector<8x128xf32>
    %cst_64 = arith.constant dense<0.000000e+00> : vector<8x128xf32>
    %90 = tpu.matmul %82, %54, %cst_64 {dimension_numbers = #tpu.dot_dimension_numbers<[1], [0], [0], [1], [0, 0, 1, 1], [], []>} : vector<8x128xf32>, vector<128x128xf32>, vector<8x128xf32> -> vector<8x128xf32>
    %91 = arith.addf %89, %90 : vector<8x128xf32>
    %cst_65 = arith.constant 0.000000e+00 : f32
    %92 = vector.broadcast %cst_65 : f32 to vector<8x128xf32>
    %93 = arith.maximumf %91, %92 : vector<8x128xf32>
    %94 = arith.index_cast %c2_i32_61 : i32 to index
    %c0_66 = arith.constant 0 : index
    %c0_67 = arith.constant 0 : index
    %95 = vector.load %arg7[%94, %c0_66, %c0_67] : memref<4x8x128xf32, #tpu.memory_space<vmem>>, vector<1x8x128xf32>
    %96 = vector.shape_cast %95 : vector<1x8x128xf32> to vector<8x128xf32>
    %97 = vector.shape_cast %93 : vector<8x128xf32> to vector<1x8x128xf32>
    tpu.vector_store %arg7[%94, %c0_66, %c0_67], %97 {strides = array<i32>} : memref<4x8x128xf32, #tpu.memory_space<vmem>>, vector<1x8x128xf32>,
    %c3_i32_68 = arith.constant 3 : i32
    %98 = arith.index_cast %c3_i32_68 : i32 to index
    %c0_69 = arith.constant 0 : index
    %c0_70 = arith.constant 0 : index
    %99 = vector.load %arg10[%98, %c0_69, %c0_70] : memref<4x8x128xf32, #tpu.memory_space<vmem>>, vector<1x8x128xf32>
    %100 = vector.shape_cast %99 : vector<1x8x128xf32> to vector<8x128xf32>
    %cst_71 = arith.constant dense<0.000000e+00> : vector<8x128xf32>
    %101 = tpu.matmul %93, %54, %cst_71 {dimension_numbers = #tpu.dot_dimension_numbers<[1], [0], [0], [1], [0, 0, 1, 1], [], []>} : vector<8x128xf32>, vector<128x128xf32>, vector<8x128xf32> -> vector<8x128xf32>
    %102 = arith.addf %100, %101 : vector<8x128xf32>
    %cst_72 = arith.constant 0.000000e+00 : f32
    %103 = vector.broadcast %cst_72 : f32 to vector<8x128xf32>
    %104 = arith.maximumf %102, %103 : vector<8x128xf32>
    %105 = arith.index_cast %c3_i32_68 : i32 to index
    %c0_73 = arith.constant 0 : index
    %c0_74 = arith.constant 0 : index
    %106 = vector.load %arg7[%105, %c0_73, %c0_74] : memref<4x8x128xf32, #tpu.memory_space<vmem>>, vector<1x8x128xf32>
    %107 = vector.shape_cast %106 : vector<1x8x128xf32> to vector<8x128xf32>
    %108 = vector.shape_cast %104 : vector<8x128xf32> to vector<1x8x128xf32>
    tpu.vector_store %arg7[%105, %c0_73, %c0_74], %108 {strides = array<i32>} : memref<4x8x128xf32, #tpu.memory_space<vmem>>, vector<1x8x128xf32>,
    %c4_i32_75 = arith.constant 4 : i32
    %c1_76 = arith.constant 1 : index
    %c0_77 = arith.constant 0 : index
    %c0_78 = arith.constant 0 : index
    %109 = vector.load %arg8[%c1_76, %c0_77, %c0_78] : memref<2x8x128xf32, #tpu.memory_space<vmem>>, vector<1x8x128xf32>
    %110 = vector.shape_cast %109 : vector<1x8x128xf32> to vector<8x128xf32>
    %111 = vector.shape_cast %104 : vector<8x128xf32> to vector<1x8x128xf32>
    tpu.vector_store %arg8[%c1_76, %c0_77, %c0_78], %111 {strides = array<i32>} : memref<2x8x128xf32, #tpu.memory_space<vmem>>, vector<1x8x128xf32>,
    return
  }
  func.func @transform_0(%arg0: i32, %arg1: i32) -> (i32, i32, i32) {
    %c0_i32 = arith.constant 0 : i32
    %c0_i32_0 = arith.constant 0 : i32
    return %arg1, %arg0, %c0_i32 : i32, i32, i32
  }
  func.func @transform_1(%arg0: i32, %arg1: i32) -> (i32, i32) {
    %c0_i32 = arith.constant 0 : i32
    %c0_i32_0 = arith.constant 0 : i32
    %c0_i32_1 = arith.constant 0 : i32
    return %c0_i32, %c0_i32_0 : i32, i32
  }
  func.func @transform_2(%arg0: i32, %arg1: i32) -> (i32, i32) {
    %c0_i32 = arith.constant 0 : i32
    %c0_i32_0 = arith.constant 0 : i32
    %c0_i32_1 = arith.constant 0 : i32
    return %c0_i32, %c0_i32_0 : i32, i32
  }
  func.func @transform_3(%arg0: i32, %arg1: i32) -> (i32, i32) {
    %c0_i32 = arith.constant 0 : i32
    %c0_i32_0 = arith.constant 0 : i32
    %c0_i32_1 = arith.constant 0 : i32
    return %c0_i32, %c0_i32_0 : i32, i32
  }
  func.func @transform_4(%arg0: i32, %arg1: i32) -> (i32, i32) {
    %c0_i32 = arith.constant 0 : i32
    %c0_i32_0 = arith.constant 0 : i32
    %c0_i32_1 = arith.constant 0 : i32
    return %c0_i32, %c0_i32_0 : i32, i32
  }
  func.func @transform_5(%arg0: i32, %arg1: i32) -> (i32, i32, i32) {
    %c0_i32 = arith.constant 0 : i32
    %c0_i32_0 = arith.constant 0 : i32
    return %arg1, %arg0, %c0_i32 : i32, i32, i32
  }
}

</mosaic_0001>

<llo_original>
// kernel: tpu_custom_call.1
$region0: #{tpu_custom_call.1}
  #allocation0 [shape = 'u32[]', space=smem, size = 0x4, offset = 0x4, fixed_abs, tag = 'smem constant byte address 0x4 - core index']
  #allocation1 [shape = 'u32[144,128]{1,0:T(1,128)}', space=vmem, size = 0x12000, scoped, tag = 'internal scratch']
  #allocation2 [shape = 'f32[2,8,128]{2,1,0:T(8,128)}', space=vmem, size = 0x2000, scoped, tag = 'scratch operand']
  #allocation3 [shape = 'f32[4,8,128]{2,1,0:T(8,128)}', space=vmem, size = 0x4000, scoped, tag = 'scratch operand']
  #allocation4 [shape = 'f32[4,8,128]{2,1,0:T(8,128)}', space=vmem, size = 0x4000, scoped, tag = 'scratch operand']
  %s0 = inlined_call_operand.hbm [shape: f32[8,8,128], index: 0, kind: input, shape index: {}]
  %s1 = inlined_call_operand.hbm [shape: f32[128,128], index: 1, kind: input, shape index: {}]
  %s2 = inlined_call_operand.hbm [shape: f32[128,128], index: 2, kind: input, shape index: {}]
  %s3 = inlined_call_operand.hbm [shape: f32[128,128], index: 3, kind: input, shape index: {}]
  %s4 = inlined_call_operand.vmem [shape: f32[1,128], index: 4, kind: input, shape index: {}]
  %s5 = inlined_call_operand.hbm [shape: f32[8,8,128], index: 5, kind: output, shape index: {}]
  %s6 = sld [smem:[#allocation0]]
  $region73: #{tpu_custom_call.1} parent=0
    _
  %s8 = ssub.s32 1, %s6
  %s9 = scalar_select 0, %s8, %s6
  $region1: #{tpu_custom_call.1} parent=0
    #allocation5 [shape = 'u8[32768]{0}', space=vmem, size = 0x8000, scoped, tag = 'input window, operand 0']
    #allocation6 [shape = 's32[2]{0}', space=sflag, size = 0x8, scoped, tag = 'scoped memory for tpu_custom_call.1']
    #allocation7 [shape = 's32[2]{0}', space=sflag, size = 0x8, scoped, tag = 'scoped memory for tpu_custom_call.1']
    #allocation8 [shape = 'u8[65536]{0}', space=vmem, size = 0x10000, scoped, tag = 'input window, operand 1, single buffered']
    #allocation9 [shape = 's32[1]{0}', space=sflag, size = 0x4, scoped, tag = 'scoped memory for tpu_custom_call.1']
    #allocation10 [shape = 'u8[65536]{0}', space=vmem, size = 0x10000, scoped, tag = 'input window, operand 2, single buffered']
    #allocation11 [shape = 'u8[65536]{0}', space=vmem, size = 0x10000, scoped, tag = 'input window, operand 3, single buffered']
    #allocation12 [shape = 's32[1]{0}', space=sflag, size = 0x4, scoped, tag = 'scoped memory for tpu_custom_call.1']
    #allocation13 [shape = 'u8[32768]{0}', space=vmem, size = 0x8000, scoped, tag = 'output window, operand 0']
    %10 = vsyncpa [#allocation6], 0
    %s11 = scalar_lea.sflag [#allocation6], 1
    %12 = vsyncpa %s11, 0
    %13 = vsyncpa [#allocation9], 0
    %14 = vsyncpa [#allocation12], 0
    %15 = vsyncpa [#allocation7], 0
    %s16 = scalar_lea.sflag [#allocation7], 1
    %17 = vsyncpa %s16, 0
    loop: start=0, step=1, limit=4
    $region2: #{tpu_custom_call.1} parent=1 // loop_pre_header
      _
    $region3: #{tpu_custom_call.1} parent=1 // loop_header
      %s19 = sphi 0, %s23
      %p20 = scmp.ge.s32.totalorder %s19, 4
      %s26 = sphi 0, %s38
      %s27 = sphi 0, %s34
      %s28 = sphi 0, %s26
      %s29 = sphi 0, %s27
      %s30 = sphi 0, %s28
      %s31 = sphi 0, %s29
      %s43 = sphi 0, %s45
      %s46 = sphi 0, %s43
      %s47 = sphi 0, %s46
      %s63 = sphi 0, %s47
      %s67 = sphi 0, %s67
      %s69 = sphi 0, %s67
      %s70 = sphi 0, %s69
      %s84 = sphi 0, %s70
      %s88 = sphi 0, %s88
      %s90 = sphi 0, %s88
      %s91 = sphi 0, %s90
      %s105 = sphi 0, %s91
      %s109 = sphi 0, %s109
      %s111 = sphi 0, %s109
      %s112 = sphi 0, %s111
      %s126 = sphi 0, %s112
      %s130 = sphi 0, %s130
      %s132 = sphi 0, %s130
      %s133 = sphi 0, %s132
      %s147 = sphi 0, %s133
      %s155 = sphi 0, %s157
      %s158 = sphi 0, %s155
      %s159 = sphi 0, %s158
      %s175 = sphi 0, %s159
    $region4: #{tpu_custom_call.1} parent=1 // loop_header_branch
      %22 = sbr.rel (%p20) target = $region8
    $region5: #{tpu_custom_call.1} parent=1 // loop_body
      %s24 = ssub.s32 %s19, 1
      %s25 = ssub.s32 %s19, 2
      %s32 = sadd.s32 1, %s27
      %p33 = scmp.ge.s32.totalorder %s32, 2
      %s34 = scalar_select %p33, 0, %s32
      %s35 = sadd.s32 1, %s26
      %s36 = scalar_select %p33, %s35, %s26
      %p37 = scmp.ge.s32.totalorder %s36, 1
      %s38 = scalar_select %p37, 0, %s36
      %s39 = ssub.s32 %s27, %s34
      %s40 = ssub.s32 %s26, %s38
      %s41 = sor.u32 %s39, %s40
      %p42 = scmp.eq.s32.totalorder %s41, 0
      %s44 = sadd.s32 %s43, 1
      %s45 = scalar_select %p42, %s43, %s44
      %p48 = pneg %p42
      %p49 = scmp.eq.s32.totalorder %s19, 1
      %p50 = por %p48, %p49
      %p51 = scmp.ne.s32.totalorder %s43, %s46
      %p52 = scmp.eq.s32.totalorder %s19, 0
      %p53 = por %p51, %p52
      %p54 = scmp.ne.s32.totalorder %s43, %s46
      %p55 = scmp.eq.s32.totalorder %s24, 1
      %p56 = por %p54, %p55
      %p57 = scmp.ne.s32.totalorder %s46, %s47
      %p58 = scmp.eq.s32.totalorder %s24, 0
      %p59 = por %p57, %p58
      %p60 = scmp.ne.s32.totalorder %s46, %s47
      %p61 = scmp.eq.s32.totalorder %s25, 1
      %p62 = por %p60, %p61
      %p64 = scmp.ne.s32.totalorder %s47, %s63
      %p65 = scmp.eq.s32.totalorder %s25, 0
      %p66 = por %p64, %p65
      %s68 = sadd.s32 %s67, 1
      %p71 = scmp.eq.s32.totalorder %s19, 1
      %p72 = scmp.ne.s32.totalorder %s67, %s69
      %p73 = scmp.eq.s32.totalorder %s19, 0
      %p74 = por %p72, %p73
      %p75 = scmp.ne.s32.totalorder %s67, %s69
      %p76 = scmp.eq.s32.totalorder %s24, 1
      %p77 = por %p75, %p76
      %p78 = scmp.ne.s32.totalorder %s69, %s70
      %p79 = scmp.eq.s32.totalorder %s24, 0
      %p80 = por %p78, %p79
      %p81 = scmp.ne.s32.totalorder %s69, %s70
      %p82 = scmp.eq.s32.totalorder %s25, 1
      %p83 = por %p81, %p82
      %p85 = scmp.ne.s32.totalorder %s70, %s84
      %p86 = scmp.eq.s32.totalorder %s25, 0
      %p87 = por %p85, %p86
      %s89 = sadd.s32 %s88, 1
      %p92 = scmp.eq.s32.totalorder %s19, 1
      %p93 = scmp.ne.s32.totalorder %s88, %s90
      %p94 = scmp.eq.s32.totalorder %s19, 0
      %p95 = por %p93, %p94
      %p96 = scmp.ne.s32.totalorder %s88, %s90
      %p97 = scmp.eq.s32.totalorder %s24, 1
      %p98 = por %p96, %p97
      %p99 = scmp.ne.s32.totalorder %s90, %s91
      %p100 = scmp.eq.s32.totalorder %s24, 0
      %p101 = por %p99, %p100
      %p102 = scmp.ne.s32.totalorder %s90, %s91
      %p103 = scmp.eq.s32.totalorder %s25, 1
      %p104 = por %p102, %p103
      %p106 = scmp.ne.s32.totalorder %s91, %s105
      %p107 = scmp.eq.s32.totalorder %s25, 0
      %p108 = por %p106, %p107
      %s110 = sadd.s32 %s109, 1
      %p113 = scmp.eq.s32.totalorder %s19, 1
      %p114 = scmp.ne.s32.totalorder %s109, %s111
      %p115 = scmp.eq.s32.totalorder %s19, 0
      %p116 = por %p114, %p115
      %p117 = scmp.ne.s32.totalorder %s109, %s111
      %p118 = scmp.eq.s32.totalorder %s24, 1
      %p119 = por %p117, %p118
      %p120 = scmp.ne.s32.totalorder %s111, %s112
      %p121 = scmp.eq.s32.totalorder %s24, 0
      %p122 = por %p120, %p121
      %p123 = scmp.ne.s32.totalorder %s111, %s112
      %p124 = scmp.eq.s32.totalorder %s25, 1
      %p125 = por %p123, %p124
      %p127 = scmp.ne.s32.totalorder %s112, %s126
      %p128 = scmp.eq.s32.totalorder %s25, 0
      %p129 = por %p127, %p128
      %s131 = sadd.s32 %s130, 1
      %p134 = scmp.eq.s32.totalorder %s19, 1
      %p135 = scmp.ne.s32.totalorder %s130, %s132
      %p136 = scmp.eq.s32.totalorder %s19, 0
      %p137 = por %p135, %p136
      %p138 = scmp.ne.s32.totalorder %s130, %s132
      %p139 = scmp.eq.s32.totalorder %s24, 1
      %p140 = por %p138, %p139
      %p141 = scmp.ne.s32.totalorder %s132, %s133
      %p142 = scmp.eq.s32.totalorder %s24, 0
      %p143 = por %p141, %p142
      %p144 = scmp.ne.s32.totalorder %s132, %s133
      %p145 = scmp.eq.s32.totalorder %s25, 1
      %p146 = por %p144, %p145
      %p148 = scmp.ne.s32.totalorder %s133, %s147
      %p149 = scmp.eq.s32.totalorder %s25, 0
      %p150 = por %p148, %p149
      %s151 = ssub.s32 %s27, %s34
      %s152 = ssub.s32 %s26, %s38
      %s153 = sor.u32 %s151, %s152
      %p154 = scmp.eq.s32.totalorder %s153, 0
      %s156 = sadd.s32 %s155, 1
      %s157 = scalar_select %p154, %s155, %s156
      %p160 = pneg %p154
      %p161 = scmp.eq.s32.totalorder %s19, 1
      %p162 = por %p160, %p161
      %p163 = scmp.ne.s32.totalorder %s155, %s158
      %p164 = scmp.eq.s32.totalorder %s19, 0
      %p165 = por %p163, %p164
      %p166 = scmp.ne.s32.totalorder %s155, %s158
      %p167 = scmp.eq.s32.totalorder %s24, 1
      %p168 = por %p166, %p167
      %p169 = scmp.ne.s32.totalorder %s158, %s159
      %p170 = scmp.eq.s32.totalorder %s24, 0
      %p171 = por %p169, %p170
      %p172 = scmp.ne.s32.totalorder %s158, %s159
      %p173 = scmp.eq.s32.totalorder %s25, 1
      %p174 = por %p172, %p173
      %p176 = scmp.ne.s32.totalorder %s159, %s175
      %p177 = scmp.eq.s32.totalorder %s25, 0
      %p178 = por %p176, %p177
      %p179 = scmp.le.s32.totalorder 1, %s19
      %p180 = scmp.lt.s32.totalorder %s19, 3
      %p181 = pnand %p179, %p180
      %p182 = pneg %p181
      // Predicated region
      $region9: #{tpu_custom_call.1} parent=5 // pred_check
        _
      $region10: #{tpu_custom_call.1} parent=5 // pred_check_branch
        %184 = sbr.rel (%p181) target = $region12
      $region11: #{tpu_custom_call.1} parent=5 // pred_region
        %s185 = ssub.s32 %s19, 1
        // Predicated region
        $region13: #{tpu_custom_call.1} parent=11 // pred_check
          %p186 = pneg %p80
        $region14: #{tpu_custom_call.1} parent=11 // pred_check_branch
          %188 = sbr.rel (%p186) target = $region16
        $region15: #{tpu_custom_call.1} parent=11 // pred_region
          %s190 = ssub.s32 2048, 2048
          %191 = vsyncadd [#allocation9], %s190
          %s192 = sshll.u32 [#allocation8], 4
          %s193 = int_to_ptr.vmem [resolvable:$true] %s192
          %198 = dma.hbm_to_vmem [thread:$0]  %s1, 2048, %s193, [#allocation9], 128, 128, 8
        $region16: #{tpu_custom_call.1} parent=11 // pred_fallthru
          _
        // Predicated region
        $region17: #{tpu_custom_call.1} parent=11 // pred_check
          %p199 = pneg %p101
        $region18: #{tpu_custom_call.1} parent=11 // pred_check_branch
          %201 = sbr.rel (%p199) target = $region20
        $region19: #{tpu_custom_call.1} parent=11 // pred_region
          %s203 = ssub.s32 2048, 2048
          %204 = vsyncadd [#allocation9], %s203
          %s205 = sshll.u32 [#allocation10], 4
          %s206 = int_to_ptr.vmem [resolvable:$true] %s205
          %211 = dma.hbm_to_vmem [thread:$0]  %s2, 2048, %s206, [#allocation9], 128, 128, 8
        $region20: #{tpu_custom_call.1} parent=11 // pred_fallthru
          _
        // Predicated region
        $region21: #{tpu_custom_call.1} parent=11 // pred_check
          %p212 = pneg %p122
        $region22: #{tpu_custom_call.1} parent=11 // pred_check_branch
          %214 = sbr.rel (%p212) target = $region24
        $region23: #{tpu_custom_call.1} parent=11 // pred_region
          %s216 = ssub.s32 2048, 2048
          %217 = vsyncadd [#allocation12], %s216
          %s218 = sshll.u32 [#allocation11], 4
          %s219 = int_to_ptr.vmem [resolvable:$true] %s218
          %224 = dma.hbm_to_vmem [thread:$0]  %s3, 2048, %s219, [#allocation12], 128, 128, 8
        $region24: #{tpu_custom_call.1} parent=11 // pred_fallthru
          _
        // Predicated region
        $region25: #{tpu_custom_call.1} parent=11 // pred_check
          %p225 = pneg %p143
        $region26: #{tpu_custom_call.1} parent=11 // pred_check_branch
          %227 = sbr.rel (%p225) target = $region28
        $region27: #{tpu_custom_call.1} parent=11 // pred_region
          _
        $region28: #{tpu_custom_call.1} parent=11 // pred_fallthru
          _
      $region12: #{tpu_custom_call.1} parent=5 // pred_fallthru
        _
      %p228 = scmp.lt.s32.totalorder %s19, 2
      // Predicated region
      $region29: #{tpu_custom_call.1} parent=5 // pred_check
        %p229 = pneg %p228
      $region30: #{tpu_custom_call.1} parent=5 // pred_check_branch
        %231 = sbr.rel (%p229) target = $region32
      $region31: #{tpu_custom_call.1} parent=5 // pred_region
        // Predicated region
        $region33: #{tpu_custom_call.1} parent=31 // pred_check
          %p232 = pneg %p53
        $region34: #{tpu_custom_call.1} parent=31 // pred_check_branch
          %234 = sbr.rel (%p232) target = $region36
        $region35: #{tpu_custom_call.1} parent=31 // pred_region
          %s235 = sand.u32 %s43, 1
          %s236 = scalar_lea.sflag [#allocation6], %s235
          %s237 = sand.u32 %s43, 1
          %s238 = smul.addr %s237, 32
          %s239 = scalar_lea.vmem [#allocation5], %s238
          %s240 = smul.u32 4, %s27
          %s242 = ssub.s32 512, 512
          %243 = vsyncadd %s236, %s242
          %s244 = sadd.s32 %s26, %s240
          %s245 = smul.addr %s244, 128
          %s246 = scalar_lea.hbm %s0, %s245
          %s247 = sshll.u32 %s239, 4
          %s248 = int_to_ptr.vmem [resolvable:$true] %s247
          %253 = dma.hbm_to_vmem [thread:$0]  %s246, 512, %s248, %s236, 128, 128, 8
        $region36: #{tpu_custom_call.1} parent=31 // pred_fallthru
          _
      $region32: #{tpu_custom_call.1} parent=5 // pred_fallthru
        _
      %p254 = scmp.le.s32.totalorder 1, %s19
      %p255 = scmp.lt.s32.totalorder %s19, 3
      %p256 = pnand %p254, %p255
      %p257 = pneg %p256
      // Predicated region
      $region37: #{tpu_custom_call.1} parent=5 // pred_check
        _
      $region38: #{tpu_custom_call.1} parent=5 // pred_check_branch
        %259 = sbr.rel (%p256) target = $region40
      $region39: #{tpu_custom_call.1} parent=5 // pred_region
        %s260 = ssub.s32 %s19, 1
        %s261 = sand.u32 %s46, 1
        %s262 = scalar_lea.sflag [#allocation6], %s261
        %s263 = sand.u32 %s46, 1
        %s264 = smul.addr %s263, 32
        %s265 = scalar_lea.vmem [#allocation5], %s264
        // Predicated region
        $region41: #{tpu_custom_call.1} parent=39 // pred_check
          %p266 = pneg %p59
        $region42: #{tpu_custom_call.1} parent=39 // pred_check_branch
          %268 = sbr.rel (%p266) target = $region44
        $region43: #{tpu_custom_call.1} parent=39 // pred_region
          %269 = dma.done %s262, 512
        $region44: #{tpu_custom_call.1} parent=39 // pred_fallthru
          _
        // Predicated region
        $region45: #{tpu_custom_call.1} parent=39 // pred_check
          %p270 = pneg %p80
        $region46: #{tpu_custom_call.1} parent=39 // pred_check_branch
          %272 = sbr.rel (%p270) target = $region48
        $region47: #{tpu_custom_call.1} parent=39 // pred_region
          %273 = dma.done [#allocation9], 2048
        $region48: #{tpu_custom_call.1} parent=39 // pred_fallthru
          _
        // Predicated region
        $region49: #{tpu_custom_call.1} parent=39 // pred_check
          %p274 = pneg %p101
        $region50: #{tpu_custom_call.1} parent=39 // pred_check_branch
          %276 = sbr.rel (%p274) target = $region52
        $region51: #{tpu_custom_call.1} parent=39 // pred_region
          %277 = dma.done [#allocation9], 2048
        $region52: #{tpu_custom_call.1} parent=39 // pred_fallthru
          _
        // Predicated region
        $region53: #{tpu_custom_call.1} parent=39 // pred_check
          %p278 = pneg %p122
        $region54: #{tpu_custom_call.1} parent=39 // pred_check_branch
          %280 = sbr.rel (%p278) target = $region56
        $region55: #{tpu_custom_call.1} parent=39 // pred_region
          %281 = dma.done [#allocation12], 2048
        $region56: #{tpu_custom_call.1} parent=39 // pred_fallthru
          _
        %s282 = sand.u32 %s46, 1
        %s283 = scalar_lea.sflag [#allocation6], %s282
        %s284 = sand.u32 %s46, 1
        %s285 = smul.addr %s284, 32
        %s286 = scalar_lea.vmem [#allocation5], %s285
        %p287 = pneg %p59
        %p288 = pneg %p56
        %p289 = pneg %p80
        %p290 = pneg %p77
        %p291 = pneg %p101
        %p292 = pneg %p98
        %p293 = pneg %p122
        %p294 = pneg %p119
        %p295 = pneg %p143
        %p296 = pneg %p140
        %p297 = pneg %p171
        %p298 = pneg %p168
        %s299 = sand.u32 %s158, 1
        %s300 = scalar_lea.sflag [#allocation7], %s299
        %s301 = sand.u32 %s158, 1
        %s302 = smul.addr %s301, 32
        %s303 = scalar_lea.vmem [#allocation13], %s302
        %s304 = smul.u32 4, %s29
        %s305 = smul.u32 4, %s29
        %p306 = scmp.eq.s32.totalorder %s29, 0
        // Predicated region
        $region57: #{tpu_custom_call.1} parent=39 // pred_check
          %p307 = pneg %p306
        $region58: #{tpu_custom_call.1} parent=39 // pred_check_branch
          %309 = sbr.rel (%p307) target = $region60
        $region59: #{tpu_custom_call.1} parent=39 // pred_region
          %310 = vst [vmem:[#allocation2] sm:$0xff] 0.0
          %311 = vst [vmem:[#allocation2 + $0x8] sm:$0xff] 0.0
        $region60: #{tpu_custom_call.1} parent=39 // pred_fallthru
          _
        %v312 = vld [vmem:[#allocation8] sm:$0xff]
        %v313 = vld [vmem:[#allocation8 + $0x8] sm:$0xff]
        %v314 = vld [vmem:[#allocation8 + $0x10] sm:$0xff]
        %v315 = vld [vmem:[#allocation8 + $0x18] sm:$0xff]
        %v316 = vld [vmem:[#allocation8 + $0x20] sm:$0xff]
        %v317 = vld [vmem:[#allocation8 + $0x28] sm:$0xff]
        %v318 = vld [vmem:[#allocation8 + $0x30] sm:$0xff]
        %v319 = vld [vmem:[#allocation8 + $0x38] sm:$0xff]
        %v320 = vld [vmem:[#allocation8 + $0x40] sm:$0xff]
        %v321 = vld [vmem:[#allocation8 + $0x48] sm:$0xff]
        %v322 = vld [vmem:[#allocation8 + $0x50] sm:$0xff]
        %v323 = vld [vmem:[#allocation8 + $0x58] sm:$0xff]
        %v324 = vld [vmem:[#allocation8 + $0x60] sm:$0xff]
        %v325 = vld [vmem:[#allocation8 + $0x68] sm:$0xff]
        %v326 = vld [vmem:[#allocation8 + $0x70] sm:$0xff]
        %v327 = vld [vmem:[#allocation8 + $0x78] sm:$0xff]
        %v328 = vld [vmem:[#allocation2] sm:$0xff]
        %v329 = vld [vmem:[%s265] sm:$0xff]
        %330 = vmatprep.subr.mxu0 0.0
        %331 = vmatpush1.msra.mxu0 %v327
        %332 = vmatprep.subr.mxu0 0.0
        %333 = vmatpush1.msra.mxu0 %v326
        %334 = vmatprep.subr.mxu0 0.0
        %335 = vmatpush1.msra.mxu0 %v325
        %336 = vmatprep.subr.mxu0 0.0
        %337 = vmatpush1.msra.mxu0 %v324
        %338 = vmatprep.subr.mxu0 0.0
        %339 = vmatpush1.msra.mxu0 %v323
        %340 = vmatprep.subr.mxu0 0.0
        %341 = vmatpush1.msra.mxu0 %v322
        %342 = vmatprep.subr.mxu0 0.0
        %343 = vmatpush1.msra.mxu0 %v321
        %344 = vmatprep.subr.mxu0 0.0
        %345 = vmatpush1.msra.mxu0 %v320
        %346 = vmatprep.subr.mxu0 0.0
        %347 = vmatpush1.msra.mxu0 %v319
        %348 = vmatprep.subr.mxu0 0.0
        %349 = vmatpush1.msra.mxu0 %v318
        %350 = vmatprep.subr.mxu0 0.0
        %351 = vmatpush1.msra.mxu0 %v317
        %352 = vmatprep.subr.mxu0 0.0
        %353 = vmatpush1.msra.mxu0 %v316
        %354 = vmatprep.subr.mxu0 0.0
        %355 = vmatpush1.msra.mxu0 %v315
        %356 = vmatprep.subr.mxu0 0.0
        %357 = vmatpush1.msra.mxu0 %v314
        %358 = vmatprep.subr.mxu0 0.0
        %359 = vmatpush1.msra.mxu0 %v313
        %360 = vmatprep.subr.mxu0 0.0
        %361 = vmatpush1.msra.mxu0 %v312
        %362 = vmatprep.subr.mxu0 0.0
        %363 = vmatpush2.msra.mxu0 0.0
        %364 = vmatprep.subr.mxu0 0.0
        %365 = vmatpush2.msra.mxu0 0.0
        %366 = vmatprep.subr.mxu0 0.0
        %367 = vmatpush2.msra.mxu0 0.0
        %368 = vmatprep.subr.mxu0 0.0
        %369 = vmatpush2.msra.mxu0 0.0
        %370 = vmatprep.subr.mxu0 0.0
        %371 = vmatpush2.msra.mxu0 0.0
        %372 = vmatprep.subr.mxu0 0.0
        %373 = vmatpush2.msra.mxu0 0.0
        %374 = vmatprep.subr.mxu0 0.0
        %375 = vmatpush2.msra.mxu0 0.0
        %376 = vmatprep.subr.mxu0 0.0
        %377 = vmatpush2.msra.mxu0 0.0
        %378 = vmatprep.subr.mxu0 0.0
        %379 = vmatpush2.msra.mxu0 0.0
        %380 = vmatprep.subr.mxu0 0.0
        %381 = vmatpush2.msra.mxu0 0.0
        %382 = vmatprep.subr.mxu0 0.0
        %383 = vmatpush2.msra.mxu0 0.0
        %384 = vmatprep.subr.mxu0 0.0
        %385 = vmatpush2.msra.mxu0 0.0
        %386 = vmatprep.subr.mxu0 0.0
        %387 = vmatpush2.msra.mxu0 0.0
        %388 = vmatprep.subr.mxu0 0.0
        %389 = vmatpush2.msra.mxu0 0.0
        %390 = vmatprep.subr.mxu0 0.0
        %391 = vmatpush2.msra.mxu0 0.0
        %392 = vmatprep.subr.mxu0 0.0
        %393 = vmatpush2.msra.mxu0 0.0
        %394 = vmatprep.mubr.f32.mxu0 0.0
        %395 = vmatmul.mubr.f32.gmra.mxu0 %v328
        %v396 = vpop.f32.mrf.mxu0
        %v397 = vadd.f32 0.0, %v396
        %v398 = vpop.f32.mrf.mxu0
        %399 = vdwg.mxu0
        %v400 = vadd.f32 %v329, %v397
        %v401 = vmax.f32 %v400, 0.0
        %402 = vst [vmem:[#allocation3] sm:$0xff] %v401
        %s403 = scalar_lea.vmem %s265, 8 [#allocation5]
        %v404 = vld [vmem:[%s403] sm:$0xff]
        %405 = vmatprep.subr.mxu0 0.0
        %406 = vmatpush1.msra.mxu0 %v327
        %407 = vmatprep.subr.mxu0 0.0
        %408 = vmatpush1.msra.mxu0 %v326
        %409 = vmatprep.subr.mxu0 0.0
        %410 = vmatpush1.msra.mxu0 %v325
        %411 = vmatprep.subr.mxu0 0.0
        %412 = vmatpush1.msra.mxu0 %v324
        %413 = vmatprep.subr.mxu0 0.0
        %414 = vmatpush1.msra.mxu0 %v323
        %415 = vmatprep.subr.mxu0 0.0
        %416 = vmatpush1.msra.mxu0 %v322
        %417 = vmatprep.subr.mxu0 0.0
        %418 = vmatpush1.msra.mxu0 %v321
        %419 = vmatprep.subr.mxu0 0.0
        %420 = vmatpush1.msra.mxu0 %v320
        %421 = vmatprep.subr.mxu0 0.0
        %422 = vmatpush1.msra.mxu0 %v319
        %423 = vmatprep.subr.mxu0 0.0
        %424 = vmatpush1.msra.mxu0 %v318
        %425 = vmatprep.subr.mxu0 0.0
        %426 = vmatpush1.msra.mxu0 %v317
        %427 = vmatprep.subr.mxu0 0.0
        %428 = vmatpush1.msra.mxu0 %v316
        %429 = vmatprep.subr.mxu0 0.0
        %430 = vmatpush1.msra.mxu0 %v315
        %431 = vmatprep.subr.mxu0 0.0
        %432 = vmatpush1.msra.mxu0 %v314
        %433 = vmatprep.subr.mxu0 0.0
        %434 = vmatpush1.msra.mxu0 %v313
        %435 = vmatprep.subr.mxu0 0.0
        %436 = vmatpush1.msra.mxu0 %v312
        %437 = vmatprep.subr.mxu0 0.0
        %438 = vmatpush2.msra.mxu0 0.0
        %439 = vmatprep.subr.mxu0 0.0
        %440 = vmatpush2.msra.mxu0 0.0
        %441 = vmatprep.subr.mxu0 0.0
        %442 = vmatpush2.msra.mxu0 0.0
        %443 = vmatprep.subr.mxu0 0.0
        %444 = vmatpush2.msra.mxu0 0.0
        %445 = vmatprep.subr.mxu0 0.0
        %446 = vmatpush2.msra.mxu0 0.0
        %447 = vmatprep.subr.mxu0 0.0
        %448 = vmatpush2.msra.mxu0 0.0
        %449 = vmatprep.subr.mxu0 0.0
        %450 = vmatpush2.msra.mxu0 0.0
        %451 = vmatprep.subr.mxu0 0.0
        %452 = vmatpush2.msra.mxu0 0.0
        %453 = vmatprep.subr.mxu0 0.0
        %454 = vmatpush2.msra.mxu0 0.0
        %455 = vmatprep.subr.mxu0 0.0
        %456 = vmatpush2.msra.mxu0 0.0
        %457 = vmatprep.subr.mxu0 0.0
        %458 = vmatpush2.msra.mxu0 0.0
        %459 = vmatprep.subr.mxu0 0.0
        %460 = vmatpush2.msra.mxu0 0.0
        %461 = vmatprep.subr.mxu0 0.0
        %462 = vmatpush2.msra.mxu0 0.0
        %463 = vmatprep.subr.mxu0 0.0
        %464 = vmatpush2.msra.mxu0 0.0
        %465 = vmatprep.subr.mxu0 0.0
        %466 = vmatpush2.msra.mxu0 0.0
        %467 = vmatprep.subr.mxu0 0.0
        %468 = vmatpush2.msra.mxu0 0.0
        %469 = vmatprep.mubr.f32.mxu0 0.0
        %470 = vmatmul.mubr.f32.gmra.mxu0 %v401
        %v471 = vpop.f32.mrf.mxu0
        %v472 = vadd.f32 0.0, %v471
        %v473 = vpop.f32.mrf.mxu0
        %474 = vdwg.mxu0
        %v475 = vadd.f32 %v404, %v472
        %v476 = vmax.f32 %v475, 0.0
        %s477 = scalar_lea.vmem [#allocation3], 8
        %478 = vst [vmem:[%s477] sm:$0xff] %v476
        %s479 = scalar_lea.vmem %s265, 16 [#allocation5]
        %v480 = vld [vmem:[%s479] sm:$0xff]
        %481 = vmatprep.subr.mxu0 0.0
        %482 = vmatpush1.msra.mxu0 %v327
        %483 = vmatprep.subr.mxu0 0.0
        %484 = vmatpush1.msra.mxu0 %v326
        %485 = vmatprep.subr.mxu0 0.0
        %486 = vmatpush1.msra.mxu0 %v325
        %487 = vmatprep.subr.mxu0 0.0
        %488 = vmatpush1.msra.mxu0 %v324
        %489 = vmatprep.subr.mxu0 0.0
        %490 = vmatpush1.msra.mxu0 %v323
        %491 = vmatprep.subr.mxu0 0.0
        %492 = vmatpush1.msra.mxu0 %v322
        %493 = vmatprep.subr.mxu0 0.0
        %494 = vmatpush1.msra.mxu0 %v321
        %495 = vmatprep.subr.mxu0 0.0
        %496 = vmatpush1.msra.mxu0 %v320
        %497 = vmatprep.subr.mxu0 0.0
        %498 = vmatpush1.msra.mxu0 %v319
        %499 = vmatprep.subr.mxu0 0.0
        %500 = vmatpush1.msra.mxu0 %v318
        %501 = vmatprep.subr.mxu0 0.0
        %502 = vmatpush1.msra.mxu0 %v317
        %503 = vmatprep.subr.mxu0 0.0
        %504 = vmatpush1.msra.mxu0 %v316
        %505 = vmatprep.subr.mxu0 0.0
        %506 = vmatpush1.msra.mxu0 %v315
        %507 = vmatprep.subr.mxu0 0.0
        %508 = vmatpush1.msra.mxu0 %v314
        %509 = vmatprep.subr.mxu0 0.0
        %510 = vmatpush1.msra.mxu0 %v313
        %511 = vmatprep.subr.mxu0 0.0
        %512 = vmatpush1.msra.mxu0 %v312
        %513 = vmatprep.subr.mxu0 0.0
        %514 = vmatpush2.msra.mxu0 0.0
        %515 = vmatprep.subr.mxu0 0.0
        %516 = vmatpush2.msra.mxu0 0.0
        %517 = vmatprep.subr.mxu0 0.0
        %518 = vmatpush2.msra.mxu0 0.0
        %519 = vmatprep.subr.mxu0 0.0
        %520 = vmatpush2.msra.mxu0 0.0
        %521 = vmatprep.subr.mxu0 0.0
        %522 = vmatpush2.msra.mxu0 0.0
        %523 = vmatprep.subr.mxu0 0.0
        %524 = vmatpush2.msra.mxu0 0.0
        %525 = vmatprep.subr.mxu0 0.0
        %526 = vmatpush2.msra.mxu0 0.0
        %527 = vmatprep.subr.mxu0 0.0
        %528 = vmatpush2.msra.mxu0 0.0
        %529 = vmatprep.subr.mxu0 0.0
        %530 = vmatpush2.msra.mxu0 0.0
        %531 = vmatprep.subr.mxu0 0.0
        %532 = vmatpush2.msra.mxu0 0.0
        %533 = vmatprep.subr.mxu0 0.0
        %534 = vmatpush2.msra.mxu0 0.0
        %535 = vmatprep.subr.mxu0 0.0
        %536 = vmatpush2.msra.mxu0 0.0
        %537 = vmatprep.subr.mxu0 0.0
        %538 = vmatpush2.msra.mxu0 0.0
        %539 = vmatprep.subr.mxu0 0.0
        %540 = vmatpush2.msra.mxu0 0.0
        %541 = vmatprep.subr.mxu0 0.0
        %542 = vmatpush2.msra.mxu0 0.0
        %543 = vmatprep.subr.mxu0 0.0
        %544 = vmatpush2.msra.mxu0 0.0
        %545 = vmatprep.mubr.f32.mxu0 0.0
        %546 = vmatmul.mubr.f32.gmra.mxu0 %v476
        %v547 = vpop.f32.mrf.mxu0
        %v548 = vadd.f32 0.0, %v547
        %v549 = vpop.f32.mrf.mxu0
        %550 = vdwg.mxu0
        %v551 = vadd.f32 %v480, %v548
        %v552 = vmax.f32 %v551, 0.0
        %s553 = scalar_lea.vmem [#allocation3], 16
        %554 = vst [vmem:[%s553] sm:$0xff] %v552
        %s555 = scalar_lea.vmem %s265, 24 [#allocation5]
        %v556 = vld [vmem:[%s555] sm:$0xff]
        %557 = vmatprep.subr.mxu0 0.0
        %558 = vmatpush1.msra.mxu0 %v327
        %559 = vmatprep.subr.mxu0 0.0
        %560 = vmatpush1.msra.mxu0 %v326
        %561 = vmatprep.subr.mxu0 0.0
        %562 = vmatpush1.msra.mxu0 %v325
        %563 = vmatprep.subr.mxu0 0.0
        %564 = vmatpush1.msra.mxu0 %v324
        %565 = vmatprep.subr.mxu0 0.0
        %566 = vmatpush1.msra.mxu0 %v323
        %567 = vmatprep.subr.mxu0 0.0
        %568 = vmatpush1.msra.mxu0 %v322
        %569 = vmatprep.subr.mxu0 0.0
        %570 = vmatpush1.msra.mxu0 %v321
        %571 = vmatprep.subr.mxu0 0.0
        %572 = vmatpush1.msra.mxu0 %v320
        %573 = vmatprep.subr.mxu0 0.0
        %574 = vmatpush1.msra.mxu0 %v319
        %575 = vmatprep.subr.mxu0 0.0
        %576 = vmatpush1.msra.mxu0 %v318
        %577 = vmatprep.subr.mxu0 0.0
        %578 = vmatpush1.msra.mxu0 %v317
        %579 = vmatprep.subr.mxu0 0.0
        %580 = vmatpush1.msra.mxu0 %v316
        %581 = vmatprep.subr.mxu0 0.0
        %582 = vmatpush1.msra.mxu0 %v315
        %583 = vmatprep.subr.mxu0 0.0
        %584 = vmatpush1.msra.mxu0 %v314
        %585 = vmatprep.subr.mxu0 0.0
        %586 = vmatpush1.msra.mxu0 %v313
        %587 = vmatprep.subr.mxu0 0.0
        %588 = vmatpush1.msra.mxu0 %v312
        %589 = vmatprep.subr.mxu0 0.0
        %590 = vmatpush2.msra.mxu0 0.0
        %591 = vmatprep.subr.mxu0 0.0
        %592 = vmatpush2.msra.mxu0 0.0
        %593 = vmatprep.subr.mxu0 0.0
        %594 = vmatpush2.msra.mxu0 0.0
        %595 = vmatprep.subr.mxu0 0.0
        %596 = vmatpush2.msra.mxu0 0.0
        %597 = vmatprep.subr.mxu0 0.0
        %598 = vmatpush2.msra.mxu0 0.0
        %599 = vmatprep.subr.mxu0 0.0
        %600 = vmatpush2.msra.mxu0 0.0
        %601 = vmatprep.subr.mxu0 0.0
        %602 = vmatpush2.msra.mxu0 0.0
        %603 = vmatprep.subr.mxu0 0.0
        %604 = vmatpush2.msra.mxu0 0.0
        %605 = vmatprep.subr.mxu0 0.0
        %606 = vmatpush2.msra.mxu0 0.0
        %607 = vmatprep.subr.mxu0 0.0
        %608 = vmatpush2.msra.mxu0 0.0
        %609 = vmatprep.subr.mxu0 0.0
        %610 = vmatpush2.msra.mxu0 0.0
        %611 = vmatprep.subr.mxu0 0.0
        %612 = vmatpush2.msra.mxu0 0.0
        %613 = vmatprep.subr.mxu0 0.0
        %614 = vmatpush2.msra.mxu0 0.0
        %615 = vmatprep.subr.mxu0 0.0
        %616 = vmatpush2.msra.mxu0 0.0
        %617 = vmatprep.subr.mxu0 0.0
        %618 = vmatpush2.msra.mxu0 0.0
        %619 = vmatprep.subr.mxu0 0.0
        %620 = vmatpush2.msra.mxu0 0.0
        %621 = vmatprep.mubr.f32.mxu0 0.0
        %622 = vmatmul.mubr.f32.gmra.mxu0 %v552
        %v623 = vpop.f32.mrf.mxu0
        %v624 = vadd.f32 0.0, %v623
        %v625 = vpop.f32.mrf.mxu0
        %626 = vdwg.mxu0
        %v627 = vadd.f32 %v556, %v624
        %v628 = vmax.f32 %v627, 0.0
        %s629 = scalar_lea.vmem [#allocation3], 24
        %630 = vst [vmem:[%s629] sm:$0xff] %v628
        %631 = vst [vmem:[#allocation2] sm:$0xff] %v628
        %v632 = vld [vmem:[#allocation10] sm:$0xff]
        %v633 = vld [vmem:[#allocation10 + $0x8] sm:$0xff]
        %v634 = vld [vmem:[#allocation10 + $0x10] sm:$0xff]
        %v635 = vld [vmem:[#allocation10 + $0x18] sm:$0xff]
        %v636 = vld [vmem:[#allocation10 + $0x20] sm:$0xff]
        %v637 = vld [vmem:[#allocation10 + $0x28] sm:$0xff]
        %v638 = vld [vmem:[#allocation10 + $0x30] sm:$0xff]
        %v639 = vld [vmem:[#allocation10 + $0x38] sm:$0xff]
        %v640 = vld [vmem:[#allocation10 + $0x40] sm:$0xff]
        %v641 = vld [vmem:[#allocation10 + $0x48] sm:$0xff]
        %v642 = vld [vmem:[#allocation10 + $0x50] sm:$0xff]
        %v643 = vld [vmem:[#allocation10 + $0x58] sm:$0xff]
        %v644 = vld [vmem:[#allocation10 + $0x60] sm:$0xff]
        %v645 = vld [vmem:[#allocation10 + $0x68] sm:$0xff]
        %v646 = vld [vmem:[#allocation10 + $0x70] sm:$0xff]
        %v647 = vld [vmem:[#allocation10 + $0x78] sm:$0xff]
        %v648 = vld [vmem:[#allocation11] sm:$0xff]
        %v649 = vld [vmem:[#allocation11 + $0x8] sm:$0xff]
        %v650 = vld [vmem:[#allocation11 + $0x10] sm:$0xff]
        %v651 = vld [vmem:[#allocation11 + $0x18] sm:$0xff]
        %v652 = vld [vmem:[#allocation11 + $0x20] sm:$0xff]
        %v653 = vld [vmem:[#allocation11 + $0x28] sm:$0xff]
        %v654 = vld [vmem:[#allocation11 + $0x30] sm:$0xff]
        %v655 = vld [vmem:[#allocation11 + $0x38] sm:$0xff]
        %v656 = vld [vmem:[#allocation11 + $0x40] sm:$0xff]
        %v657 = vld [vmem:[#allocation11 + $0x48] sm:$0xff]
        %v658 = vld [vmem:[#allocation11 + $0x50] sm:$0xff]
        %v659 = vld [vmem:[#allocation11 + $0x58] sm:$0xff]
        %v660 = vld [vmem:[#allocation11 + $0x60] sm:$0xff]
        %v661 = vld [vmem:[#allocation11 + $0x68] sm:$0xff]
        %v662 = vld [vmem:[#allocation11 + $0x70] sm:$0xff]
        %v663 = vld [vmem:[#allocation11 + $0x78] sm:$0xff]
        %v664 = vld [vmem:[%s4] sm:$0x1]
        %v665 = vld [vmem:[#allocation3] sm:$0xff]
        %v666 = vld [vmem:[#allocation3 + $0x8] sm:$0xff]
        %v667 = vld [vmem:[#allocation3 + $0x10] sm:$0xff]
        %v668 = vld [vmem:[#allocation3 + $0x18] sm:$0xff]
        %v670 = vlaneseq
        %v671 = vshrl.u32 %v670, 7
        %v672 = vsub.s32 0, %v671
        %v673 = vrot.slane %v664, %v672
        %675 = vmatprep.subr.mxu0 0.0
        %676 = vmatpush1.msra.mxu0 %v647
        %677 = vmatprep.subr.mxu0 0.0
        %678 = vmatpush1.msra.mxu0 %v646
        %679 = vmatprep.subr.mxu0 0.0
        %680 = vmatpush1.msra.mxu0 %v645
        %681 = vmatprep.subr.mxu0 0.0
        %682 = vmatpush1.msra.mxu0 %v644
        %683 = vmatprep.subr.mxu0 0.0
        %684 = vmatpush1.msra.mxu0 %v643
        %685 = vmatprep.subr.mxu0 0.0
        %686 = vmatpush1.msra.mxu0 %v642
        %687 = vmatprep.subr.mxu0 0.0
        %688 = vmatpush1.msra.mxu0 %v641
        %689 = vmatprep.subr.mxu0 0.0
        %690 = vmatpush1.msra.mxu0 %v640
        %691 = vmatprep.subr.mxu0 0.0
        %692 = vmatpush1.msra.mxu0 %v639
        %693 = vmatprep.subr.mxu0 0.0
        %694 = vmatpush1.msra.mxu0 %v638
        %695 = vmatprep.subr.mxu0 0.0
        %696 = vmatpush1.msra.mxu0 %v637
        %697 = vmatprep.subr.mxu0 0.0
        %698 = vmatpush1.msra.mxu0 %v636
        %699 = vmatprep.subr.mxu0 0.0
        %700 = vmatpush1.msra.mxu0 %v635
        %701 = vmatprep.subr.mxu0 0.0
        %702 = vmatpush1.msra.mxu0 %v634
        %703 = vmatprep.subr.mxu0 0.0
        %704 = vmatpush1.msra.mxu0 %v633
        %705 = vmatprep.subr.mxu0 0.0
        %706 = vmatpush1.msra.mxu0 %v632
        %707 = vmatprep.subr.mxu0 0.0
        %708 = vmatpush2.msra.mxu0 0.0
        %709 = vmatprep.subr.mxu0 0.0
        %710 = vmatpush2.msra.mxu0 0.0
        %711 = vmatprep.subr.mxu0 0.0
        %712 = vmatpush2.msra.mxu0 0.0
        %713 = vmatprep.subr.mxu0 0.0
        %714 = vmatpush2.msra.mxu0 0.0
        %715 = vmatprep.subr.mxu0 0.0
        %716 = vmatpush2.msra.mxu0 0.0
        %717 = vmatprep.subr.mxu0 0.0
        %718 = vmatpush2.msra.mxu0 0.0
        %719 = vmatprep.subr.mxu0 0.0
        %720 = vmatpush2.msra.mxu0 0.0
        %721 = vmatprep.subr.mxu0 0.0
        %722 = vmatpush2.msra.mxu0 0.0
        %723 = vmatprep.subr.mxu0 0.0
        %724 = vmatpush2.msra.mxu0 0.0
        %725 = vmatprep.subr.mxu0 0.0
        %726 = vmatpush2.msra.mxu0 0.0
        %727 = vmatprep.subr.mxu0 0.0
        %728 = vmatpush2.msra.mxu0 0.0
        %729 = vmatprep.subr.mxu0 0.0
        %730 = vmatpush2.msra.mxu0 0.0
        %731 = vmatprep.subr.mxu0 0.0
        %732 = vmatpush2.msra.mxu0 0.0
        %733 = vmatprep.subr.mxu0 0.0
        %734 = vmatpush2.msra.mxu0 0.0
        %735 = vmatprep.subr.mxu0 0.0
        %736 = vmatpush2.msra.mxu0 0.0
        %737 = vmatprep.subr.mxu0 0.0
        %738 = vmatpush2.msra.mxu0 0.0
        %739 = vmatprep.mubr.f32.mxu0 0.0
        %740 = vmatmul.mubr.f32.gmra.mxu0 %v665
        %v741 = vpop.f32.mrf.mxu0
        %v742 = vadd.f32 %v673, %v741
        %v743 = vpop.f32.mrf.mxu0
        %744 = vmatprep.mubr.f32.mxu0 0.0
        %745 = vmatmul.mubr.f32.gmra.mxu0 %v666
        %v746 = vpop.f32.mrf.mxu0
        %v747 = vadd.f32 %v673, %v746
        %v748 = vpop.f32.mrf.mxu0
        %749 = vmatprep.mubr.f32.mxu0 0.0
        %750 = vmatmul.mubr.f32.gmra.mxu0 %v667
        %v751 = vpop.f32.mrf.mxu0
        %v752 = vadd.f32 %v673, %v751
        %v753 = vpop.f32.mrf.mxu0
        %754 = vmatprep.mubr.f32.mxu0 0.0
        %755 = vmatmul.mubr.f32.gmra.mxu0 %v668
        %v756 = vpop.f32.mrf.mxu0
        %v757 = vadd.f32 %v673, %v756
        %v758 = vpop.f32.mrf.mxu0
        %759 = vdwg.mxu0
        %760 = vst [vmem:[#allocation4] sm:$0xff] %v742
        %761 = vst [vmem:[#allocation4 + $0x8] sm:$0xff] %v747
        %762 = vst [vmem:[#allocation4 + $0x10] sm:$0xff] %v752
        %763 = vst [vmem:[#allocation4 + $0x18] sm:$0xff] %v757
        %s764 = scalar_lea.vmem [#allocation2], 8
        %v765 = vld [vmem:[%s764] sm:$0xff]
        %v766 = vld [vmem:[#allocation4] sm:$0xff]
        %767 = vmatprep.subr.mxu0 0.0
        %768 = vmatpush1.msra.mxu0 %v663
        %769 = vmatprep.subr.mxu0 0.0
        %770 = vmatpush1.msra.mxu0 %v662
        %771 = vmatprep.subr.mxu0 0.0
        %772 = vmatpush1.msra.mxu0 %v661
        %773 = vmatprep.subr.mxu0 0.0
        %774 = vmatpush1.msra.mxu0 %v660
        %775 = vmatprep.subr.mxu0 0.0
        %776 = vmatpush1.msra.mxu0 %v659
        %777 = vmatprep.subr.mxu0 0.0
        %778 = vmatpush1.msra.mxu0 %v658
        %779 = vmatprep.subr.mxu0 0.0
        %780 = vmatpush1.msra.mxu0 %v657
        %781 = vmatprep.subr.mxu0 0.0
        %782 = vmatpush1.msra.mxu0 %v656
        %783 = vmatprep.subr.mxu0 0.0
        %784 = vmatpush1.msra.mxu0 %v655
        %785 = vmatprep.subr.mxu0 0.0
        %786 = vmatpush1.msra.mxu0 %v654
        %787 = vmatprep.subr.mxu0 0.0
        %788 = vmatpush1.msra.mxu0 %v653
        %789 = vmatprep.subr.mxu0 0.0
        %790 = vmatpush1.msra.mxu0 %v652
        %791 = vmatprep.subr.mxu0 0.0
        %792 = vmatpush1.msra.mxu0 %v651
        %793 = vmatprep.subr.mxu0 0.0
        %794 = vmatpush1.msra.mxu0 %v650
        %795 = vmatprep.subr.mxu0 0.0
        %796 = vmatpush1.msra.mxu0 %v649
        %797 = vmatprep.subr.mxu0 0.0
        %798 = vmatpush1.msra.mxu0 %v648
        %799 = vmatprep.subr.mxu0 0.0
        %800 = vmatpush2.msra.mxu0 0.0
        %801 = vmatprep.subr.mxu0 0.0
        %802 = vmatpush2.msra.mxu0 0.0
        %803 = vmatprep.subr.mxu0 0.0
        %804 = vmatpush2.msra.mxu0 0.0
        %805 = vmatprep.subr.mxu0 0.0
        %806 = vmatpush2.msra.mxu0 0.0
        %807 = vmatprep.subr.mxu0 0.0
        %808 = vmatpush2.msra.mxu0 0.0
        %809 = vmatprep.subr.mxu0 0.0
        %810 = vmatpush2.msra.mxu0 0.0
        %811 = vmatprep.subr.mxu0 0.0
        %812 = vmatpush2.msra.mxu0 0.0
        %813 = vmatprep.subr.mxu0 0.0
        %814 = vmatpush2.msra.mxu0 0.0
        %815 = vmatprep.subr.mxu0 0.0
        %816 = vmatpush2.msra.mxu0 0.0
        %817 = vmatprep.subr.mxu0 0.0
        %818 = vmatpush2.msra.mxu0 0.0
        %819 = vmatprep.subr.mxu0 0.0
        %820 = vmatpush2.msra.mxu0 0.0
        %821 = vmatprep.subr.mxu0 0.0
        %822 = vmatpush2.msra.mxu0 0.0
        %823 = vmatprep.subr.mxu0 0.0
        %824 = vmatpush2.msra.mxu0 0.0
        %825 = vmatprep.subr.mxu0 0.0
        %826 = vmatpush2.msra.mxu0 0.0
        %827 = vmatprep.subr.mxu0 0.0
        %828 = vmatpush2.msra.mxu0 0.0
        %829 = vmatprep.subr.mxu0 0.0
        %830 = vmatpush2.msra.mxu0 0.0
        %831 = vmatprep.mubr.f32.mxu0 0.0
        %832 = vmatmul.mubr.f32.gmra.mxu0 %v765
        %v833 = vpop.f32.mrf.mxu0
        %v834 = vadd.f32 0.0, %v833
        %v835 = vpop.f32.mrf.mxu0
        %836 = vdwg.mxu0
        %v837 = vadd.f32 %v766, %v834
        %v838 = vmax.f32 %v837, 0.0
        %839 = vst [vmem:[%s303] sm:$0xff] %v838
        %s840 = scalar_lea.vmem [#allocation4], 8
        %v841 = vld [vmem:[%s840] sm:$0xff]
        %842 = vmatprep.subr.mxu0 0.0
        %843 = vmatpush1.msra.mxu0 %v663
        %844 = vmatprep.subr.mxu0 0.0
        %845 = vmatpush1.msra.mxu0 %v662
        %846 = vmatprep.subr.mxu0 0.0
        %847 = vmatpush1.msra.mxu0 %v661
        %848 = vmatprep.subr.mxu0 0.0
        %849 = vmatpush1.msra.mxu0 %v660
        %850 = vmatprep.subr.mxu0 0.0
        %851 = vmatpush1.msra.mxu0 %v659
        %852 = vmatprep.subr.mxu0 0.0
        %853 = vmatpush1.msra.mxu0 %v658
        %854 = vmatprep.subr.mxu0 0.0
        %855 = vmatpush1.msra.mxu0 %v657
        %856 = vmatprep.subr.mxu0 0.0
        %857 = vmatpush1.msra.mxu0 %v656
        %858 = vmatprep.subr.mxu0 0.0
        %859 = vmatpush1.msra.mxu0 %v655
        %860 = vmatprep.subr.mxu0 0.0
        %861 = vmatpush1.msra.mxu0 %v654
        %862 = vmatprep.subr.mxu0 0.0
        %863 = vmatpush1.msra.mxu0 %v653
        %864 = vmatprep.subr.mxu0 0.0
        %865 = vmatpush1.msra.mxu0 %v652
        %866 = vmatprep.subr.mxu0 0.0
        %867 = vmatpush1.msra.mxu0 %v651
        %868 = vmatprep.subr.mxu0 0.0
        %869 = vmatpush1.msra.mxu0 %v650
        %870 = vmatprep.subr.mxu0 0.0
        %871 = vmatpush1.msra.mxu0 %v649
        %872 = vmatprep.subr.mxu0 0.0
        %873 = vmatpush1.msra.mxu0 %v648
        %874 = vmatprep.subr.mxu0 0.0
        %875 = vmatpush2.msra.mxu0 0.0
        %876 = vmatprep.subr.mxu0 0.0
        %877 = vmatpush2.msra.mxu0 0.0
        %878 = vmatprep.subr.mxu0 0.0
        %879 = vmatpush2.msra.mxu0 0.0
        %880 = vmatprep.subr.mxu0 0.0
        %881 = vmatpush2.msra.mxu0 0.0
        %882 = vmatprep.subr.mxu0 0.0
        %883 = vmatpush2.msra.mxu0 0.0
        %884 = vmatprep.subr.mxu0 0.0
        %885 = vmatpush2.msra.mxu0 0.0
        %886 = vmatprep.subr.mxu0 0.0
        %887 = vmatpush2.msra.mxu0 0.0
        %888 = vmatprep.subr.mxu0 0.0
        %889 = vmatpush2.msra.mxu0 0.0
        %890 = vmatprep.subr.mxu0 0.0
        %891 = vmatpush2.msra.mxu0 0.0
        %892 = vmatprep.subr.mxu0 0.0
        %893 = vmatpush2.msra.mxu0 0.0
        %894 = vmatprep.subr.mxu0 0.0
        %895 = vmatpush2.msra.mxu0 0.0
        %896 = vmatprep.subr.mxu0 0.0
        %897 = vmatpush2.msra.mxu0 0.0
        %898 = vmatprep.subr.mxu0 0.0
        %899 = vmatpush2.msra.mxu0 0.0
        %900 = vmatprep.subr.mxu0 0.0
        %901 = vmatpush2.msra.mxu0 0.0
        %902 = vmatprep.subr.mxu0 0.0
        %903 = vmatpush2.msra.mxu0 0.0
        %904 = vmatprep.subr.mxu0 0.0
        %905 = vmatpush2.msra.mxu0 0.0
        %906 = vmatprep.mubr.f32.mxu0 0.0
        %907 = vmatmul.mubr.f32.gmra.mxu0 %v838
        %v908 = vpop.f32.mrf.mxu0
        %v909 = vadd.f32 0.0, %v908
        %v910 = vpop.f32.mrf.mxu0
        %911 = vdwg.mxu0
        %v912 = vadd.f32 %v841, %v909
        %v913 = vmax.f32 %v912, 0.0
        %s914 = scalar_lea.vmem %s303, 8 [#allocation13]
        %915 = vst [vmem:[%s914] sm:$0xff] %v913
        %s916 = scalar_lea.vmem [#allocation4], 16
        %v917 = vld [vmem:[%s916] sm:$0xff]
        %918 = vmatprep.subr.mxu0 0.0
        %919 = vmatpush1.msra.mxu0 %v663
        %920 = vmatprep.subr.mxu0 0.0
        %921 = vmatpush1.msra.mxu0 %v662
        %922 = vmatprep.subr.mxu0 0.0
        %923 = vmatpush1.msra.mxu0 %v661
        %924 = vmatprep.subr.mxu0 0.0
        %925 = vmatpush1.msra.mxu0 %v660
        %926 = vmatprep.subr.mxu0 0.0
        %927 = vmatpush1.msra.mxu0 %v659
        %928 = vmatprep.subr.mxu0 0.0
        %929 = vmatpush1.msra.mxu0 %v658
        %930 = vmatprep.subr.mxu0 0.0
        %931 = vmatpush1.msra.mxu0 %v657
        %932 = vmatprep.subr.mxu0 0.0
        %933 = vmatpush1.msra.mxu0 %v656
        %934 = vmatprep.subr.mxu0 0.0
        %935 = vmatpush1.msra.mxu0 %v655
        %936 = vmatprep.subr.mxu0 0.0
        %937 = vmatpush1.msra.mxu0 %v654
        %938 = vmatprep.subr.mxu0 0.0
        %939 = vmatpush1.msra.mxu0 %v653
        %940 = vmatprep.subr.mxu0 0.0
        %941 = vmatpush1.msra.mxu0 %v652
        %942 = vmatprep.subr.mxu0 0.0
        %943 = vmatpush1.msra.mxu0 %v651
        %944 = vmatprep.subr.mxu0 0.0
        %945 = vmatpush1.msra.mxu0 %v650
        %946 = vmatprep.subr.mxu0 0.0
        %947 = vmatpush1.msra.mxu0 %v649
        %948 = vmatprep.subr.mxu0 0.0
        %949 = vmatpush1.msra.mxu0 %v648
        %950 = vmatprep.subr.mxu0 0.0
        %951 = vmatpush2.msra.mxu0 0.0
        %952 = vmatprep.subr.mxu0 0.0
        %953 = vmatpush2.msra.mxu0 0.0
        %954 = vmatprep.subr.mxu0 0.0
        %955 = vmatpush2.msra.mxu0 0.0
        %956 = vmatprep.subr.mxu0 0.0
        %957 = vmatpush2.msra.mxu0 0.0
        %958 = vmatprep.subr.mxu0 0.0
        %959 = vmatpush2.msra.mxu0 0.0
        %960 = vmatprep.subr.mxu0 0.0
        %961 = vmatpush2.msra.mxu0 0.0
        %962 = vmatprep.subr.mxu0 0.0
        %963 = vmatpush2.msra.mxu0 0.0
        %964 = vmatprep.subr.mxu0 0.0
        %965 = vmatpush2.msra.mxu0 0.0
        %966 = vmatprep.subr.mxu0 0.0
        %967 = vmatpush2.msra.mxu0 0.0
        %968 = vmatprep.subr.mxu0 0.0
        %969 = vmatpush2.msra.mxu0 0.0
        %970 = vmatprep.subr.mxu0 0.0
        %971 = vmatpush2.msra.mxu0 0.0
        %972 = vmatprep.subr.mxu0 0.0
        %973 = vmatpush2.msra.mxu0 0.0
        %974 = vmatprep.subr.mxu0 0.0
        %975 = vmatpush2.msra.mxu0 0.0
        %976 = vmatprep.subr.mxu0 0.0
        %977 = vmatpush2.msra.mxu0 0.0
        %978 = vmatprep.subr.mxu0 0.0
        %979 = vmatpush2.msra.mxu0 0.0
        %980 = vmatprep.subr.mxu0 0.0
        %981 = vmatpush2.msra.mxu0 0.0
        %982 = vmatprep.mubr.f32.mxu0 0.0
        %983 = vmatmul.mubr.f32.gmra.mxu0 %v913
        %v984 = vpop.f32.mrf.mxu0
        %v985 = vadd.f32 0.0, %v984
        %v986 = vpop.f32.mrf.mxu0
        %987 = vdwg.mxu0
        %v988 = vadd.f32 %v917, %v985
        %v989 = vmax.f32 %v988, 0.0
        %s990 = scalar_lea.vmem %s303, 16 [#allocation13]
        %991 = vst [vmem:[%s990] sm:$0xff] %v989
        %s992 = scalar_lea.vmem [#allocation4], 24
        %v993 = vld [vmem:[%s992] sm:$0xff]
        %994 = vmatprep.subr.mxu0 0.0
        %995 = vmatpush1.msra.mxu0 %v663
        %996 = vmatprep.subr.mxu0 0.0
        %997 = vmatpush1.msra.mxu0 %v662
        %998 = vmatprep.subr.mxu0 0.0
        %999 = vmatpush1.msra.mxu0 %v661
        %1000 = vmatprep.subr.mxu0 0.0
        %1001 = vmatpush1.msra.mxu0 %v660
        %1002 = vmatprep.subr.mxu0 0.0
        %1003 = vmatpush1.msra.mxu0 %v659
        %1004 = vmatprep.subr.mxu0 0.0
        %1005 = vmatpush1.msra.mxu0 %v658
        %1006 = vmatprep.subr.mxu0 0.0
        %1007 = vmatpush1.msra.mxu0 %v657
        %1008 = vmatprep.subr.mxu0 0.0
        %1009 = vmatpush1.msra.mxu0 %v656
        %1010 = vmatprep.subr.mxu0 0.0
        %1011 = vmatpush1.msra.mxu0 %v655
        %1012 = vmatprep.subr.mxu0 0.0
        %1013 = vmatpush1.msra.mxu0 %v654
        %1014 = vmatprep.subr.mxu0 0.0
        %1015 = vmatpush1.msra.mxu0 %v653
        %1016 = vmatprep.subr.mxu0 0.0
        %1017 = vmatpush1.msra.mxu0 %v652
        %1018 = vmatprep.subr.mxu0 0.0
        %1019 = vmatpush1.msra.mxu0 %v651
        %1020 = vmatprep.subr.mxu0 0.0
        %1021 = vmatpush1.msra.mxu0 %v650
        %1022 = vmatprep.subr.mxu0 0.0
        %1023 = vmatpush1.msra.mxu0 %v649
        %1024 = vmatprep.subr.mxu0 0.0
        %1025 = vmatpush1.msra.mxu0 %v648
        %1026 = vmatprep.subr.mxu0 0.0
        %1027 = vmatpush2.msra.mxu0 0.0
        %1028 = vmatprep.subr.mxu0 0.0
        %1029 = vmatpush2.msra.mxu0 0.0
        %1030 = vmatprep.subr.mxu0 0.0
        %1031 = vmatpush2.msra.mxu0 0.0
        %1032 = vmatprep.subr.mxu0 0.0
        %1033 = vmatpush2.msra.mxu0 0.0
        %1034 = vmatprep.subr.mxu0 0.0
        %1035 = vmatpush2.msra.mxu0 0.0
        %1036 = vmatprep.subr.mxu0 0.0
        %1037 = vmatpush2.msra.mxu0 0.0
        %1038 = vmatprep.subr.mxu0 0.0
        %1039 = vmatpush2.msra.mxu0 0.0
        %1040 = vmatprep.subr.mxu0 0.0
        %1041 = vmatpush2.msra.mxu0 0.0
        %1042 = vmatprep.subr.mxu0 0.0
        %1043 = vmatpush2.msra.mxu0 0.0
        %1044 = vmatprep.subr.mxu0 0.0
        %1045 = vmatpush2.msra.mxu0 0.0
        %1046 = vmatprep.subr.mxu0 0.0
        %1047 = vmatpush2.msra.mxu0 0.0
        %1048 = vmatprep.subr.mxu0 0.0
        %1049 = vmatpush2.msra.mxu0 0.0
        %1050 = vmatprep.subr.mxu0 0.0
        %1051 = vmatpush2.msra.mxu0 0.0
        %1052 = vmatprep.subr.mxu0 0.0
        %1053 = vmatpush2.msra.mxu0 0.0
        %1054 = vmatprep.subr.mxu0 0.0
        %1055 = vmatpush2.msra.mxu0 0.0
        %1056 = vmatprep.subr.mxu0 0.0
        %1057 = vmatpush2.msra.mxu0 0.0
        %1058 = vmatprep.mubr.f32.mxu0 0.0
        %1059 = vmatmul.mubr.f32.gmra.mxu0 %v989
        %v1060 = vpop.f32.mrf.mxu0
        %v1061 = vadd.f32 0.0, %v1060
        %v1062 = vpop.f32.mrf.mxu0
        %1063 = vdwg.mxu0
        %v1064 = vadd.f32 %v993, %v1061
        %v1065 = vmax.f32 %v1064, 0.0
        %s1066 = scalar_lea.vmem %s303, 24 [#allocation13]
        %1067 = vst [vmem:[%s1066] sm:$0xff] %v1065
        %1068 = vst [vmem:[%s764] sm:$0xff] %v1065
        %s1069 = sand.u32 %s158, 1
        %s1070 = scalar_lea.sflag [#allocation7], %s1069
        %s1071 = sand.u32 %s158, 1
        %s1072 = smul.addr %s1071, 32
        %s1073 = scalar_lea.vmem [#allocation13], %s1072
        // Predicated region
        $region61: #{tpu_custom_call.1} parent=39 // pred_check
          %p1074 = pneg %p168
        $region62: #{tpu_custom_call.1} parent=39 // pred_check_branch
          %1076 = sbr.rel (%p1074) target = $region64
        $region63: #{tpu_custom_call.1} parent=39 // pred_region
          %s1077 = smul.u32 4, %s29
          %s1079 = ssub.s32 512, 512
          %1080 = vsyncadd %s1070, %s1079
          %s1081 = sadd.s32 %s28, %s1077
          %s1082 = smul.addr %s1081, 128
          %s1083 = scalar_lea.hbm %s5, %s1082
          %s1084 = sshll.u32 %s1073, 4
          %s1085 = int_to_ptr.vmem [resolvable:$true] %s1084
          %1090 = dma.vmem_to_hbm [thread:$0]  %s1085, 512, %s1083, %s1070, 128, 128, 8
        $region64: #{tpu_custom_call.1} parent=39 // pred_fallthru
          _
      $region40: #{tpu_custom_call.1} parent=5 // pred_fallthru
        _
      %p1091 = scmp.le.s32.totalorder 2, %s19
      // Predicated region
      $region65: #{tpu_custom_call.1} parent=5 // pred_check
        %p1092 = pneg %p1091
      $region66: #{tpu_custom_call.1} parent=5 // pred_check_branch
        %1094 = sbr.rel (%p1092) target = $region68
      $region67: #{tpu_custom_call.1} parent=5 // pred_region
        %s1095 = ssub.s32 %s19, 2
        // Predicated region
        $region69: #{tpu_custom_call.1} parent=67 // pred_check
          %p1096 = pneg %p174
        $region70: #{tpu_custom_call.1} parent=67 // pred_check_branch
          %1098 = sbr.rel (%p1096) target = $region72
        $region71: #{tpu_custom_call.1} parent=67 // pred_region
          %s1099 = sand.u32 %s159, 1
          %s1100 = scalar_lea.sflag [#allocation7], %s1099
          %s1101 = sand.u32 %s159, 1
          %s1102 = smul.addr %s1101, 32
          %s1103 = scalar_lea.vmem [#allocation13], %s1102
          %1104 = dma.done %s1100, 512
        $region72: #{tpu_custom_call.1} parent=67 // pred_fallthru
          _
      $region68: #{tpu_custom_call.1} parent=5 // pred_fallthru
        _
    $region6: #{tpu_custom_call.1} parent=1 // loop_footer
      %s23 = sadd.s32 1, %s19
    $region7: #{tpu_custom_call.1} parent=1 // loop_footer_branch
      %18 = sbr.rel target = $region3
    $region8: #{tpu_custom_call.1} parent=1 // loop_exit
      _
    %1105 = vsyncpa [#allocation6], 1
    %s1106 = scalar_lea.sflag [#allocation6], 1
    %1107 = vsyncpa %s1106, 1
    %1108 = vsyncpa [#allocation9], 1
    %1109 = vsyncpa [#allocation12], 1
    %1110 = vsyncpa [#allocation7], 1
    %s1111 = scalar_lea.sflag [#allocation7], 1
    %1112 = vsyncpa %s1111, 1

</llo_original>
